<compile_context>
chip_gen: v7x
topology: tpu7x:2x2x1
jax: 0.10.0
libtpu: 0.0.40
codegen_flags: <defaults>
</compile_context>

<pallas_src>
import functools
import math

import jax
import jax.numpy as jnp
from jax.experimental import pallas as pl
from jax.experimental.pallas import tpu as pltpu

_NEG_INF = -1e9
_MXU_DTYPE = jnp.bfloat16            # matmul operand dtype (f32 accumulate)
_VMEM_LIMIT = 48 * 1024 * 1024       # raised scoped-VMEM limit (safe on v5e/v6e/v7x)


def _const_spec(shape):
    """BlockSpec for a grid-invariant operand of a 1-D grid: constant index_map,
    single-buffered (double-buffering an invariant block only wastes VMEM)."""
    zeros = (0,) * len(shape)
    return pl.BlockSpec(shape, lambda i: zeros, pipeline_mode=pl.Buffered(1))


def _layer_norm(x, gamma, beta, eps):
    """Annotated-transformer LayerNorm: UNBIASED std (divide by D-1) and eps
    added to std (not variance).  One per-row divide + broadcast multiplies."""
    d = x.shape[-1]
    mean = jnp.mean(x, axis=-1, keepdims=True)
    diff = x - mean
    var = jnp.sum(diff * diff, axis=-1, keepdims=True) / (d - 1)
    inv = 1.0 / (jnp.sqrt(var) + eps)                      # (rows, 1)
    return diff * inv * gamma + beta


# ----------------------------------------------------------------------------
# Attention sublayer:  x + W_o(MHA(LN(x), kv, kv, mask))        (dropout = id)
# ----------------------------------------------------------------------------
def _attn_sublayer_kernel(x_ref, kv_ref, mask_ref, g_ref, b_ref,
                          wq_ref, bq_ref, wk_ref, bk_ref, wv_ref, bv_ref,
                          wo_ref, bo_ref, o_ref, *, nb_head, eps, norm_kv):
    x = x_ref[0].astype(jnp.float32)                       # (Sq, D)
    mask = mask_ref[0]                                     # (Sq, Skv), 1=keep 0=mask
    sq, d = x.shape
    d_k = d // nb_head

    normed = _layer_norm(x, g_ref[...], b_ref[...], eps)   # query source
    if norm_kv:
        kv_n = normed                                      # self-attn: K/V = LN(x)
    else:
        kv_n = kv_ref[0].astype(jnp.float32)               # src-attn: K/V = memory

    nb = normed.astype(_MXU_DTYPE)
    kb = kv_n.astype(_MXU_DTYPE)

    # Full-width projections (best MXU utilization), f32 accumulation.
    q = jnp.dot(nb, wq_ref[...], preferred_element_type=jnp.float32) + bq_ref[...]
    k = jnp.dot(kb, wk_ref[...], preferred_element_type=jnp.float32) + bk_ref[...]
    v = jnp.dot(kb, wv_ref[...], preferred_element_type=jnp.float32) + bv_ref[...]
    q = q * (1.0 / math.sqrt(d_k))                         # fold 1/sqrt(d_k) into Q

    out = jnp.zeros((sq, d), jnp.float32)
    for h in range(nb_head):                               # static unroll over heads
        sl = slice(h * d_k, (h + 1) * d_k)
        qh = q[:, sl].astype(_MXU_DTYPE)                   # (Sq, d_k)
        kh = k[:, sl].astype(_MXU_DTYPE)                   # (Skv, d_k)
        vh = v[:, sl].astype(_MXU_DTYPE)                   # (Skv, d_k)
        # scores = qh @ kh^T  (contract last dims; no explicit transpose)
        scores = jax.lax.dot_general(qh, kh, (((1,), (1,)), ((), ())),
                                     preferred_element_type=jnp.float32)
        scores = jnp.where(mask > 0.0, scores, _NEG_INF)
        m = jnp.max(scores, axis=-1, keepdims=True)
        e = jnp.exp(scores - m)
        p = e * (1.0 / jnp.sum(e, axis=-1, keepdims=True))  # softmax over keys
        # attention dropout: identity (eval mode)
        ctx = jnp.dot(p.astype(_MXU_DTYPE), vh, preferred_element_type=jnp.float32)
        # output projection: W_o passed pre-reshaped as (H, d_k, D) -> no
        # unaligned sublane slicing and no lane-concatenate inside the kernel.
        out = out + jnp.dot(ctx.astype(_MXU_DTYPE), wo_ref[h],
                            preferred_element_type=jnp.float32)
    out = out + bo_ref[...]
    # residual dropout: identity (eval mode)
    o_ref[0] = (x + out).astype(o_ref.dtype)


def attention_sublayer(x, kv, mask, gamma, beta, wq, bq, wk, bk, wv, bv, wo, bo,
                       *, nb_head, eps=1e-6, norm_kv=False):
    b, sq, d = x.shape
    skv = kv.shape[1]
    assert d % nb_head == 0
    d_k = d // nb_head

    mask_f = jnp.broadcast_to(jnp.asarray(mask, jnp.float32), (b, sq, skv))
    row = lambda v, n: jnp.asarray(v, jnp.float32).reshape(1, n)
    wo_h = jnp.asarray(wo, _MXU_DTYPE).reshape(nb_head, d_k, d)

    kernel = functools.partial(_attn_sublayer_kernel,
                               nb_head=nb_head, eps=eps, norm_kv=norm_kv)
    return pl.pallas_call(
        kernel,
        out_shape=jax.ShapeDtypeStruct((b, sq, d), x.dtype),
        grid=(b,),
        in_specs=[
            pl.BlockSpec((1, sq, d), lambda i: (i, 0, 0)),      # x (residual / query)
            pl.BlockSpec((1, skv, d), lambda i: (i, 0, 0)),     # K/V source
            pl.BlockSpec((1, sq, skv), lambda i: (i, 0, 0)),    # mask
            _const_spec((1, d)), _const_spec((1, d)),           # LN gamma, beta
            _const_spec((d, d)), _const_spec((1, d)),           # Wq, bq
            _const_spec((d, d)), _const_spec((1, d)),           # Wk, bk
            _const_spec((d, d)), _const_spec((1, d)),           # Wv, bv
            _const_spec((nb_head, d_k, d)), _const_spec((1, d)),  # Wo (per-head), bo
        ],
        out_specs=pl.BlockSpec((1, sq, d), lambda i: (i, 0, 0)),
        compiler_params=pltpu.CompilerParams(
            dimension_semantics=("parallel",),       # independent batches -> megacore
            vmem_limit_bytes=_VMEM_LIMIT),
    )(x, kv, mask_f,
      row(gamma, d), row(beta, d),
      jnp.asarray(wq, _MXU_DTYPE), row(bq, d),
      jnp.asarray(wk, _MXU_DTYPE), row(bk, d),
      jnp.asarray(wv, _MXU_DTYPE), row(bv, d),
      wo_h, row(bo, d))


# ----------------------------------------------------------------------------
# Feed-forward sublayer:  x + W2(relu(W1 @ LN(x) + b1)) + b2    (dropout = id)
# ----------------------------------------------------------------------------
def _ffn_sublayer_kernel(x_ref, g_ref, b_ref, w1_ref, b1_ref, w2_ref, b2_ref,
                         o_ref, *, eps):
    x = x_ref[...].astype(jnp.float32)                     # (tm, D)
    normed = _layer_norm(x, g_ref[...], b_ref[...], eps)
    h = jnp.dot(normed.astype(_MXU_DTYPE), w1_ref[...],
                preferred_element_type=jnp.float32) + b1_ref[...]
    h = jnp.maximum(h, 0.0)                                # ReLU
    # inner dropout: identity (eval mode)
    y = jnp.dot(h.astype(_MXU_DTYPE), w2_ref[...],
                preferred_element_type=jnp.float32) + b2_ref[...]
    # residual dropout: identity (eval mode)
    o_ref[...] = (x + y).astype(o_ref.dtype)


def ffn_sublayer(x, gamma, beta, w1, b1, w2, b2, *, eps=1e-6, tm=256):
    b, s, d = x.shape
    d_ff = w1.shape[1]
    n = b * s
    tm = min(tm, n)
    sub = 16 if x.dtype == jnp.bfloat16 else 8             # sublane packing for output
    tm = max(sub, (tm // sub) * sub)
    assert n % tm == 0, f"rows ({n}) must be divisible by the row tile ({tm})"
    xf = x.reshape(n, d)

    out = pl.pallas_call(
        functools.partial(_ffn_sublayer_kernel, eps=eps),
        out_shape=jax.ShapeDtypeStruct((n, d), x.dtype),
        grid=(n // tm,),
        in_specs=[
            pl.BlockSpec((tm, d), lambda i: (i, 0)),            # x rows
            _const_spec((1, d)), _const_spec((1, d)),           # LN gamma, beta
            _const_spec((d, d_ff)), _const_spec((1, d_ff)),     # W1, b1
            _const_spec((d_ff, d)), _const_spec((1, d)),        # W2, b2
        ],
        out_specs=pl.BlockSpec((tm, d), lambda i: (i, 0)),
        compiler_params=pltpu.CompilerParams(
            dimension_semantics=("parallel",),
            vmem_limit_bytes=_VMEM_LIMIT),
    )(xf,
      jnp.asarray(gamma, jnp.float32).reshape(1, d),
      jnp.asarray(beta, jnp.float32).reshape(1, d),
      jnp.asarray(w1, _MXU_DTYPE), jnp.asarray(b1, jnp.float32).reshape(1, d_ff),
      jnp.asarray(w2, _MXU_DTYPE), jnp.asarray(b2, jnp.float32).reshape(1, d))
    return out.reshape(b, s, d)


# ----------------------------------------------------------------------------
# Full DecoderLayer forward
# ----------------------------------------------------------------------------
def decoder_layer(x, memory, src_mask, tgt_mask, params, *, nb_head,
                  eps=1e-6, tm=256):
    """Eval-mode DecoderLayer forward (dropout layers are identity)."""
    p = params
    # sublayer 0: masked self-attention (Q = K = V = LN0(x))
    x = attention_sublayer(x, x, tgt_mask, p["ln0_g"], p["ln0_b"],
                           p["self_wq"], p["self_bq"], p["self_wk"], p["self_bk"],
                           p["self_wv"], p["self_bv"], p["self_wo"], p["self_bo"],
                           nb_head=nb_head, eps=eps, norm_kv=True)
    # sublayer 1: source attention (Q = LN1(x), K = V = memory)
    x = attention_sublayer(x, memory, src_mask, p["ln1_g"], p["ln1_b"],
                           p["src_wq"], p["src_bq"], p["src_wk"], p["src_bk"],
                           p["src_wv"], p["src_bv"], p["src_wo"], p["src_bo"],
                           nb_head=nb_head, eps=eps, norm_kv=False)
    # sublayer 2: position-wise feed-forward
    x = ffn_sublayer(x, p["ln2_g"], p["ln2_b"], p["ff_w1"], p["ff_b1"],
                     p["ff_w2"], p["ff_b2"], eps=eps, tm=tm)
    return x


if __name__ == "__main__":
    B, S_TGT, S_SRC, D, H, D_FF = 2, 8, 8, 32, 4, 64
    key = jax.random.PRNGKey(0)
    ks = jax.random.split(key, 12)

    def lin(k, fan_in, fan_out):
        w = jax.random.normal(k, (fan_in, fan_out), jnp.float32) / math.sqrt(fan_in)
        return w, jnp.zeros((fan_out,), jnp.float32)

    x = jax.random.normal(ks[0], (B, S_TGT, D), jnp.float32)
    memory = jax.random.normal(ks[1], (B, S_SRC, D), jnp.float32)

    # Causal target mask and full source mask (annotated-transformer shapes).
    tgt_mask = jnp.tril(jnp.ones((S_TGT, S_TGT), jnp.float32))[None]   # (1, S, S)
    src_mask = jnp.ones((B, 1, S_SRC), jnp.float32)                    # (B, 1, S_src)

    params = {}
    for i in range(3):
        params[f"ln{i}_g"] = jnp.ones((D,), jnp.float32)
        params[f"ln{i}_b"] = jnp.zeros((D,), jnp.float32)
    params["self_wq"], params["self_bq"] = lin(ks[2], D, D)
    params["self_wk"], params["self_bk"] = lin(ks[3], D, D)
    params["self_wv"], params["self_bv"] = lin(ks[4], D, D)
    params["self_wo"], params["self_bo"] = lin(ks[5], D, D)
    params["src_wq"], params["src_bq"] = lin(ks[6], D, D)
    params["src_wk"], params["src_bk"] = lin(ks[7], D, D)
    params["src_wv"], params["src_bv"] = lin(ks[8], D, D)
    params["src_wo"], params["src_bo"] = lin(ks[9], D, D)
    params["ff_w1"], params["ff_b1"] = lin(ks[10], D, D_FF)
    params["ff_w2"], params["ff_b2"] = lin(ks[11], D_FF, D)

    out = decoder_layer(x, memory, src_mask, tgt_mask, params, nb_head=H)
    out = jax.block_until_ready(out)
    assert out.shape == (B, S_TGT, D)
    assert bool(jnp.all(jnp.isfinite(out)))
    print("KERNEL_OK")
</pallas_src>

<mosaic_0001>
module attributes {stable_mosaic.version = 11 : i64} {
  func.func @_attn_sublayer_kernel(%arg0: i32, %arg1: memref<1x8x32xf32, #tpu.memory_space<vmem>>, %arg2: memref<1x8x32xf32, #tpu.memory_space<vmem>>, %arg3: memref<1x8x8xf32, #tpu.memory_space<vmem>>, %arg4: memref<1x32xf32, #tpu.memory_space<vmem>>, %arg5: memref<1x32xf32, #tpu.memory_space<vmem>>, %arg6: memref<32x32xbf16, #tpu.memory_space<vmem>>, %arg7: memref<1x32xf32, #tpu.memory_space<vmem>>, %arg8: memref<32x32xbf16, #tpu.memory_space<vmem>>, %arg9: memref<1x32xf32, #tpu.memory_space<vmem>>, %arg10: memref<32x32xbf16, #tpu.memory_space<vmem>>, %arg11: memref<1x32xf32, #tpu.memory_space<vmem>>, %arg12: memref<4x8x32xbf16, #tpu.memory_space<vmem>>, %arg13: memref<1x32xf32, #tpu.memory_space<vmem>>, %arg14: memref<1x8x32xf32, #tpu.memory_space<vmem>>) attributes {dimension_semantics = [#tpu.dimension_semantics<parallel>], iteration_bounds = array<i64: 2>, scalar_prefetch = 0 : i64, scratch_operands = 0 : i64, tpu.core_type = #tpu.core_type<tc>, window_params = [{transform_indices = @transform_0, window_bounds = array<i64: 1, 8, 32>}, {transform_indices = @transform_1, window_bounds = array<i64: 1, 8, 32>}, {transform_indices = @transform_2, window_bounds = array<i64: 1, 8, 8>}, {pipeline_mode = #tpu.pipeline_mode<synchronous>, transform_indices = @transform_3, window_bounds = array<i64: 1, 32>}, {pipeline_mode = #tpu.pipeline_mode<synchronous>, transform_indices = @transform_4, window_bounds = array<i64: 1, 32>}, {pipeline_mode = #tpu.pipeline_mode<synchronous>, transform_indices = @transform_5, window_bounds = array<i64: 32, 32>}, {pipeline_mode = #tpu.pipeline_mode<synchronous>, transform_indices = @transform_6, window_bounds = array<i64: 1, 32>}, {pipeline_mode = #tpu.pipeline_mode<synchronous>, transform_indices = @transform_7, window_bounds = array<i64: 32, 32>}, {pipeline_mode = #tpu.pipeline_mode<synchronous>, transform_indices = @transform_8, window_bounds = array<i64: 1, 32>}, {pipeline_mode = #tpu.pipeline_mode<synchronous>, transform_indices = @transform_9, window_bounds = array<i64: 32, 32>}, {pipeline_mode = #tpu.pipeline_mode<synchronous>, transform_indices = @transform_10, window_bounds = array<i64: 1, 32>}, {pipeline_mode = #tpu.pipeline_mode<synchronous>, transform_indices = @transform_11, window_bounds = array<i64: 4, 8, 32>}, {pipeline_mode = #tpu.pipeline_mode<synchronous>, transform_indices = @transform_12, window_bounds = array<i64: 1, 32>}, {transform_indices = @transform_13, window_bounds = array<i64: 1, 8, 32>}]} {
    %c0 = arith.constant 0 : index
    %c0_0 = arith.constant 0 : index
    %c0_1 = arith.constant 0 : index
    %0 = vector.load %arg1[%c0, %c0_0, %c0_1] : memref<1x8x32xf32, #tpu.memory_space<vmem>>, vector<1x8x32xf32>
    %1 = vector.shape_cast %0 : vector<1x8x32xf32> to vector<8x32xf32>
    %c0_2 = arith.constant 0 : index
    %c0_3 = arith.constant 0 : index
    %c0_4 = arith.constant 0 : index
    %2 = vector.load %arg3[%c0_2, %c0_3, %c0_4] : memref<1x8x8xf32, #tpu.memory_space<vmem>>, vector<1x8x8xf32>
    %3 = vector.shape_cast %2 : vector<1x8x8xf32> to vector<8x8xf32>
    %c0_5 = arith.constant 0 : index
    %c0_6 = arith.constant 0 : index
    %4 = vector.load %arg4[%c0_5, %c0_6] : memref<1x32xf32, #tpu.memory_space<vmem>>, vector<1x32xf32>
    %c0_7 = arith.constant 0 : index
    %c0_8 = arith.constant 0 : index
    %5 = vector.load %arg5[%c0_7, %c0_8] : memref<1x32xf32, #tpu.memory_space<vmem>>, vector<1x32xf32>
    %cst = arith.constant dense<0.000000e+00> : vector<8xf32>
    %6 = vector.multi_reduction <add>, %1, %cst [1] : vector<8x32xf32> to vector<8xf32>
    %7 = vector.shape_cast %6 : vector<8xf32> to vector<8x1xf32>
    %cst_9 = arith.constant 3.200000e+01 : f32
    %8 = vector.broadcast %cst_9 : f32 to vector<8x1xf32>
    %9 = arith.divf %7, %8 : vector<8x1xf32>
    %10 = vector.broadcast %9 : vector<8x1xf32> to vector<8x32xf32>
    %11 = arith.subf %1, %10 : vector<8x32xf32>
    %12 = arith.mulf %11, %11 : vector<8x32xf32>
    %cst_10 = arith.constant dense<0.000000e+00> : vector<8xf32>
    %13 = vector.multi_reduction <add>, %12, %cst_10 [1] : vector<8x32xf32> to vector<8xf32>
    %14 = vector.shape_cast %13 : vector<8xf32> to vector<8x1xf32>
    %cst_11 = arith.constant 3.100000e+01 : f32
    %15 = vector.broadcast %cst_11 : f32 to vector<8x1xf32>
    %16 = arith.divf %14, %15 : vector<8x1xf32>
    %17 = math.sqrt %16 : vector<8x1xf32>
    %cst_12 = arith.constant 9.99999997E-7 : f32
    %18 = vector.broadcast %cst_12 : f32 to vector<8x1xf32>
    %19 = arith.addf %17, %18 : vector<8x1xf32>
    %cst_13 = arith.constant 1.000000e+00 : f32
    %20 = vector.broadcast %cst_13 : f32 to vector<8x1xf32>
    %21 = arith.divf %20, %19 : vector<8x1xf32>
    %22 = vector.broadcast %21 : vector<8x1xf32> to vector<8x32xf32>
    %23 = arith.mulf %11, %22 : vector<8x32xf32>
    %24 = vector.broadcast %4 : vector<1x32xf32> to vector<8x32xf32>
    %25 = arith.mulf %23, %24 : vector<8x32xf32>
    %26 = vector.broadcast %5 : vector<1x32xf32> to vector<8x32xf32>
    %27 = arith.addf %25, %26 : vector<8x32xf32>
    %28 = arith.truncf %27 : vector<8x32xf32> to vector<8x32xbf16>
    %29 = arith.truncf %27 : vector<8x32xf32> to vector<8x32xbf16>
    %c0_14 = arith.constant 0 : index
    %c0_15 = arith.constant 0 : index
    %30 = vector.load %arg6[%c0_14, %c0_15] : memref<32x32xbf16, #tpu.memory_space<vmem>>, vector<32x32xbf16>
    %cst_16 = arith.constant dense<0.000000e+00> : vector<8x32xf32>
    %31 = tpu.matmul %28, %30, %cst_16 {dimension_numbers = #tpu.dot_dimension_numbers<[1], [0], [0], [1], [0, 0, 1, 1], [], []>} : vector<8x32xbf16>, vector<32x32xbf16>, vector<8x32xf32> -> vector<8x32xf32>
    %c0_17 = arith.constant 0 : index
    %c0_18 = arith.constant 0 : index
    %32 = vector.load %arg7[%c0_17, %c0_18] : memref<1x32xf32, #tpu.memory_space<vmem>>, vector<1x32xf32>
    %33 = vector.broadcast %32 : vector<1x32xf32> to vector<8x32xf32>
    %34 = arith.addf %31, %33 : vector<8x32xf32>
    %c0_19 = arith.constant 0 : index
    %c0_20 = arith.constant 0 : index
    %35 = vector.load %arg8[%c0_19, %c0_20] : memref<32x32xbf16, #tpu.memory_space<vmem>>, vector<32x32xbf16>
    %cst_21 = arith.constant dense<0.000000e+00> : vector<8x32xf32>
    %36 = tpu.matmul %29, %35, %cst_21 {dimension_numbers = #tpu.dot_dimension_numbers<[1], [0], [0], [1], [0, 0, 1, 1], [], []>} : vector<8x32xbf16>, vector<32x32xbf16>, vector<8x32xf32> -> vector<8x32xf32>
    %c0_22 = arith.constant 0 : index
    %c0_23 = arith.constant 0 : index
    %37 = vector.load %arg9[%c0_22, %c0_23] : memref<1x32xf32, #tpu.memory_space<vmem>>, vector<1x32xf32>
    %38 = vector.broadcast %37 : vector<1x32xf32> to vector<8x32xf32>
    %39 = arith.addf %36, %38 : vector<8x32xf32>
    %c0_24 = arith.constant 0 : index
    %c0_25 = arith.constant 0 : index
    %40 = vector.load %arg10[%c0_24, %c0_25] : memref<32x32xbf16, #tpu.memory_space<vmem>>, vector<32x32xbf16>
    %cst_26 = arith.constant dense<0.000000e+00> : vector<8x32xf32>
    %41 = tpu.matmul %29, %40, %cst_26 {dimension_numbers = #tpu.dot_dimension_numbers<[1], [0], [0], [1], [0, 0, 1, 1], [], []>} : vector<8x32xbf16>, vector<32x32xbf16>, vector<8x32xf32> -> vector<8x32xf32>
    %c0_27 = arith.constant 0 : index
    %c0_28 = arith.constant 0 : index
    %42 = vector.load %arg11[%c0_27, %c0_28] : memref<1x32xf32, #tpu.memory_space<vmem>>, vector<1x32xf32>
    %43 = vector.broadcast %42 : vector<1x32xf32> to vector<8x32xf32>
    %44 = arith.addf %41, %43 : vector<8x32xf32>
    %cst_29 = arith.constant 0.353553385 : f32
    %45 = vector.broadcast %cst_29 : f32 to vector<8x32xf32>
    %46 = arith.mulf %34, %45 : vector<8x32xf32>
    %cst_30 = arith.constant 0.000000e+00 : f32
    %47 = vector.broadcast %cst_30 : f32 to vector<8x32xf32>
    %48 = vector.extract_strided_slice %46 {offsets = [0, 0], sizes = [8, 8], strides = [1, 1]} : vector<8x32xf32> to vector<8x8xf32>
    %49 = arith.truncf %48 : vector<8x8xf32> to vector<8x8xbf16>
    %50 = vector.extract_strided_slice %39 {offsets = [0, 0], sizes = [8, 8], strides = [1, 1]} : vector<8x32xf32> to vector<8x8xf32>
    %51 = arith.truncf %50 : vector<8x8xf32> to vector<8x8xbf16>
    %52 = vector.extract_strided_slice %44 {offsets = [0, 0], sizes = [8, 8], strides = [1, 1]} : vector<8x32xf32> to vector<8x8xf32>
    %53 = arith.truncf %52 : vector<8x8xf32> to vector<8x8xbf16>
    %cst_31 = arith.constant dense<0.000000e+00> : vector<8x8xf32>
    %54 = tpu.matmul %49, %51, %cst_31 {dimension_numbers = #tpu.dot_dimension_numbers<[1], [1], [0], [0], [0, 0, 1, 0], [], []>} : vector<8x8xbf16>, vector<8x8xbf16>, vector<8x8xf32> -> vector<8x8xf32>
    %cst_32 = arith.constant 0.000000e+00 : f32
    %55 = vector.broadcast %cst_32 : f32 to vector<8x8xf32>
    %56 = arith.cmpf ogt, %3, %55 : vector<8x8xf32>
    %cst_33 = arith.constant -1.000000e+09 : f32
    %57 = vector.broadcast %cst_33 : f32 to vector<8x8xf32>
    %58 = arith.select %56, %54, %57 : vector<8x8xi1>, vector<8x8xf32>
    %cst_34 = arith.constant dense<0xFF800000> : vector<8xf32>
    %59 = vector.multi_reduction <maximumf>, %58, %cst_34 [1] : vector<8x8xf32> to vector<8xf32>
    %60 = vector.shape_cast %59 : vector<8xf32> to vector<8x1xf32>
    %61 = vector.broadcast %60 : vector<8x1xf32> to vector<8x8xf32>
    %62 = arith.subf %58, %61 : vector<8x8xf32>
    %63 = math.exp %62 : vector<8x8xf32>
    %cst_35 = arith.constant dense<0.000000e+00> : vector<8xf32>
    %64 = vector.multi_reduction <add>, %63, %cst_35 [1] : vector<8x8xf32> to vector<8xf32>
    %65 = vector.shape_cast %64 : vector<8xf32> to vector<8x1xf32>
    %cst_36 = arith.constant 1.000000e+00 : f32
    %66 = vector.broadcast %cst_36 : f32 to vector<8x1xf32>
    %67 = arith.divf %66, %65 : vector<8x1xf32>
    %68 = vector.broadcast %67 : vector<8x1xf32> to vector<8x8xf32>
    %69 = arith.mulf %63, %68 : vector<8x8xf32>
    %70 = arith.truncf %69 : vector<8x8xf32> to vector<8x8xbf16>
    %cst_37 = arith.constant dense<0.000000e+00> : vector<8x8xf32>
    %71 = tpu.matmul %70, %53, %cst_37 {dimension_numbers = #tpu.dot_dimension_numbers<[1], [0], [0], [1], [0, 0, 1, 1], [], []>} : vector<8x8xbf16>, vector<8x8xbf16>, vector<8x8xf32> -> vector<8x8xf32>
    %72 = arith.truncf %71 : vector<8x8xf32> to vector<8x8xbf16>
    %c0_38 = arith.constant 0 : index
    %c0_39 = arith.constant 0 : index
    %c0_40 = arith.constant 0 : index
    %73 = vector.load %arg12[%c0_38, %c0_39, %c0_40] : memref<4x8x32xbf16, #tpu.memory_space<vmem>>, vector<1x8x32xbf16>
    %74 = vector.shape_cast %73 : vector<1x8x32xbf16> to vector<8x32xbf16>
    %cst_41 = arith.constant dense<0.000000e+00> : vector<8x32xf32>
    %75 = tpu.matmul %72, %74, %cst_41 {dimension_numbers = #tpu.dot_dimension_numbers<[1], [0], [0], [1], [0, 0, 1, 1], [], []>} : vector<8x8xbf16>, vector<8x32xbf16>, vector<8x32xf32> -> vector<8x32xf32>
    %76 = arith.addf %47, %75 : vector<8x32xf32>
    %77 = vector.extract_strided_slice %46 {offsets = [0, 8], sizes = [8, 8], strides = [1, 1]} : vector<8x32xf32> to vector<8x8xf32>
    %78 = arith.truncf %77 : vector<8x8xf32> to vector<8x8xbf16>
    %79 = vector.extract_strided_slice %39 {offsets = [0, 8], sizes = [8, 8], strides = [1, 1]} : vector<8x32xf32> to vector<8x8xf32>
    %80 = arith.truncf %79 : vector<8x8xf32> to vector<8x8xbf16>
    %81 = vector.extract_strided_slice %44 {offsets = [0, 8], sizes = [8, 8], strides = [1, 1]} : vector<8x32xf32> to vector<8x8xf32>
    %82 = arith.truncf %81 : vector<8x8xf32> to vector<8x8xbf16>
    %cst_42 = arith.constant dense<0.000000e+00> : vector<8x8xf32>
    %83 = tpu.matmul %78, %80, %cst_42 {dimension_numbers = #tpu.dot_dimension_numbers<[1], [1], [0], [0], [0, 0, 1, 0], [], []>} : vector<8x8xbf16>, vector<8x8xbf16>, vector<8x8xf32> -> vector<8x8xf32>
    %cst_43 = arith.constant 0.000000e+00 : f32
    %84 = vector.broadcast %cst_43 : f32 to vector<8x8xf32>
    %85 = arith.cmpf ogt, %3, %84 : vector<8x8xf32>
    %cst_44 = arith.constant -1.000000e+09 : f32
    %86 = vector.broadcast %cst_44 : f32 to vector<8x8xf32>
    %87 = arith.select %85, %83, %86 : vector<8x8xi1>, vector<8x8xf32>
    %cst_45 = arith.constant dense<0xFF800000> : vector<8xf32>
    %88 = vector.multi_reduction <maximumf>, %87, %cst_45 [1] : vector<8x8xf32> to vector<8xf32>
    %89 = vector.shape_cast %88 : vector<8xf32> to vector<8x1xf32>
    %90 = vector.broadcast %89 : vector<8x1xf32> to vector<8x8xf32>
    %91 = arith.subf %87, %90 : vector<8x8xf32>
    %92 = math.exp %91 : vector<8x8xf32>
    %cst_46 = arith.constant dense<0.000000e+00> : vector<8xf32>
    %93 = vector.multi_reduction <add>, %92, %cst_46 [1] : vector<8x8xf32> to vector<8xf32>
    %94 = vector.shape_cast %93 : vector<8xf32> to vector<8x1xf32>
    %cst_47 = arith.constant 1.000000e+00 : f32
    %95 = vector.broadcast %cst_47 : f32 to vector<8x1xf32>
    %96 = arith.divf %95, %94 : vector<8x1xf32>
    %97 = vector.broadcast %96 : vector<8x1xf32> to vector<8x8xf32>
    %98 = arith.mulf %92, %97 : vector<8x8xf32>
    %99 = arith.truncf %98 : vector<8x8xf32> to vector<8x8xbf16>
    %cst_48 = arith.constant dense<0.000000e+00> : vector<8x8xf32>
    %100 = tpu.matmul %99, %82, %cst_48 {dimension_numbers = #tpu.dot_dimension_numbers<[1], [0], [0], [1], [0, 0, 1, 1], [], []>} : vector<8x8xbf16>, vector<8x8xbf16>, vector<8x8xf32> -> vector<8x8xf32>
    %101 = arith.truncf %100 : vector<8x8xf32> to vector<8x8xbf16>
    %c1 = arith.constant 1 : index
    %c0_49 = arith.constant 0 : index
    %c0_50 = arith.constant 0 : index
    %102 = vector.load %arg12[%c1, %c0_49, %c0_50] : memref<4x8x32xbf16, #tpu.memory_space<vmem>>, vector<1x8x32xbf16>
    %103 = vector.shape_cast %102 : vector<1x8x32xbf16> to vector<8x32xbf16>
    %cst_51 = arith.constant dense<0.000000e+00> : vector<8x32xf32>
    %104 = tpu.matmul %101, %103, %cst_51 {dimension_numbers = #tpu.dot_dimension_numbers<[1], [0], [0], [1], [0, 0, 1, 1], [], []>} : vector<8x8xbf16>, vector<8x32xbf16>, vector<8x32xf32> -> vector<8x32xf32>
    %105 = arith.addf %76, %104 : vector<8x32xf32>
    %106 = vector.extract_strided_slice %46 {offsets = [0, 16], sizes = [8, 8], strides = [1, 1]} : vector<8x32xf32> to vector<8x8xf32>
    %107 = arith.truncf %106 : vector<8x8xf32> to vector<8x8xbf16>
    %108 = vector.extract_strided_slice %39 {offsets = [0, 16], sizes = [8, 8], strides = [1, 1]} : vector<8x32xf32> to vector<8x8xf32>
    %109 = arith.truncf %108 : vector<8x8xf32> to vector<8x8xbf16>
    %110 = vector.extract_strided_slice %44 {offsets = [0, 16], sizes = [8, 8], strides = [1, 1]} : vector<8x32xf32> to vector<8x8xf32>
    %111 = arith.truncf %110 : vector<8x8xf32> to vector<8x8xbf16>
    %cst_52 = arith.constant dense<0.000000e+00> : vector<8x8xf32>
    %112 = tpu.matmul %107, %109, %cst_52 {dimension_numbers = #tpu.dot_dimension_numbers<[1], [1], [0], [0], [0, 0, 1, 0], [], []>} : vector<8x8xbf16>, vector<8x8xbf16>, vector<8x8xf32> -> vector<8x8xf32>
    %cst_53 = arith.constant 0.000000e+00 : f32
    %113 = vector.broadcast %cst_53 : f32 to vector<8x8xf32>
    %114 = arith.cmpf ogt, %3, %113 : vector<8x8xf32>
    %cst_54 = arith.constant -1.000000e+09 : f32
    %115 = vector.broadcast %cst_54 : f32 to vector<8x8xf32>
    %116 = arith.select %114, %112, %115 : vector<8x8xi1>, vector<8x8xf32>
    %cst_55 = arith.constant dense<0xFF800000> : vector<8xf32>
    %117 = vector.multi_reduction <maximumf>, %116, %cst_55 [1] : vector<8x8xf32> to vector<8xf32>
    %118 = vector.shape_cast %117 : vector<8xf32> to vector<8x1xf32>
    %119 = vector.broadcast %118 : vector<8x1xf32> to vector<8x8xf32>
    %120 = arith.subf %116, %119 : vector<8x8xf32>
    %121 = math.exp %120 : vector<8x8xf32>
    %cst_56 = arith.constant dense<0.000000e+00> : vector<8xf32>
    %122 = vector.multi_reduction <add>, %121, %cst_56 [1] : vector<8x8xf32> to vector<8xf32>
    %123 = vector.shape_cast %122 : vector<8xf32> to vector<8x1xf32>
    %cst_57 = arith.constant 1.000000e+00 : f32
    %124 = vector.broadcast %cst_57 : f32 to vector<8x1xf32>
    %125 = arith.divf %124, %123 : vector<8x1xf32>
    %126 = vector.broadcast %125 : vector<8x1xf32> to vector<8x8xf32>
    %127 = arith.mulf %121, %126 : vector<8x8xf32>
    %128 = arith.truncf %127 : vector<8x8xf32> to vector<8x8xbf16>
    %cst_58 = arith.constant dense<0.000000e+00> : vector<8x8xf32>
    %129 = tpu.matmul %128, %111, %cst_58 {dimension_numbers = #tpu.dot_dimension_numbers<[1], [0], [0], [1], [0, 0, 1, 1], [], []>} : vector<8x8xbf16>, vector<8x8xbf16>, vector<8x8xf32> -> vector<8x8xf32>
    %130 = arith.truncf %129 : vector<8x8xf32> to vector<8x8xbf16>
    %c2 = arith.constant 2 : index
    %c0_59 = arith.constant 0 : index
    %c0_60 = arith.constant 0 : index
    %131 = vector.load %arg12[%c2, %c0_59, %c0_60] : memref<4x8x32xbf16, #tpu.memory_space<vmem>>, vector<1x8x32xbf16>
    %132 = vector.shape_cast %131 : vector<1x8x32xbf16> to vector<8x32xbf16>
    %cst_61 = arith.constant dense<0.000000e+00> : vector<8x32xf32>
    %133 = tpu.matmul %130, %132, %cst_61 {dimension_numbers = #tpu.dot_dimension_numbers<[1], [0], [0], [1], [0, 0, 1, 1], [], []>} : vector<8x8xbf16>, vector<8x32xbf16>, vector<8x32xf32> -> vector<8x32xf32>
    %134 = arith.addf %105, %133 : vector<8x32xf32>
    %135 = vector.extract_strided_slice %46 {offsets = [0, 24], sizes = [8, 8], strides = [1, 1]} : vector<8x32xf32> to vector<8x8xf32>
    %136 = arith.truncf %135 : vector<8x8xf32> to vector<8x8xbf16>
    %137 = vector.extract_strided_slice %39 {offsets = [0, 24], sizes = [8, 8], strides = [1, 1]} : vector<8x32xf32> to vector<8x8xf32>
    %138 = arith.truncf %137 : vector<8x8xf32> to vector<8x8xbf16>
    %139 = vector.extract_strided_slice %44 {offsets = [0, 24], sizes = [8, 8], strides = [1, 1]} : vector<8x32xf32> to vector<8x8xf32>
    %140 = arith.truncf %139 : vector<8x8xf32> to vector<8x8xbf16>
    %cst_62 = arith.constant dense<0.000000e+00> : vector<8x8xf32>
    %141 = tpu.matmul %136, %138, %cst_62 {dimension_numbers = #tpu.dot_dimension_numbers<[1], [1], [0], [0], [0, 0, 1, 0], [], []>} : vector<8x8xbf16>, vector<8x8xbf16>, vector<8x8xf32> -> vector<8x8xf32>
    %cst_63 = arith.constant 0.000000e+00 : f32
    %142 = vector.broadcast %cst_63 : f32 to vector<8x8xf32>
    %143 = arith.cmpf ogt, %3, %142 : vector<8x8xf32>
    %cst_64 = arith.constant -1.000000e+09 : f32
    %144 = vector.broadcast %cst_64 : f32 to vector<8x8xf32>
    %145 = arith.select %143, %141, %144 : vector<8x8xi1>, vector<8x8xf32>
    %cst_65 = arith.constant dense<0xFF800000> : vector<8xf32>
    %146 = vector.multi_reduction <maximumf>, %145, %cst_65 [1] : vector<8x8xf32> to vector<8xf32>
    %147 = vector.shape_cast %146 : vector<8xf32> to vector<8x1xf32>
    %148 = vector.broadcast %147 : vector<8x1xf32> to vector<8x8xf32>
    %149 = arith.subf %145, %148 : vector<8x8xf32>
    %150 = math.exp %149 : vector<8x8xf32>
    %cst_66 = arith.constant dense<0.000000e+00> : vector<8xf32>
    %151 = vector.multi_reduction <add>, %150, %cst_66 [1] : vector<8x8xf32> to vector<8xf32>
    %152 = vector.shape_cast %151 : vector<8xf32> to vector<8x1xf32>
    %cst_67 = arith.constant 1.000000e+00 : f32
    %153 = vector.broadcast %cst_67 : f32 to vector<8x1xf32>
    %154 = arith.divf %153, %152 : vector<8x1xf32>
    %155 = vector.broadcast %154 : vector<8x1xf32> to vector<8x8xf32>
    %156 = arith.mulf %150, %155 : vector<8x8xf32>
    %157 = arith.truncf %156 : vector<8x8xf32> to vector<8x8xbf16>
    %cst_68 = arith.constant dense<0.000000e+00> : vector<8x8xf32>
    %158 = tpu.matmul %157, %140, %cst_68 {dimension_numbers = #tpu.dot_dimension_numbers<[1], [0], [0], [1], [0, 0, 1, 1], [], []>} : vector<8x8xbf16>, vector<8x8xbf16>, vector<8x8xf32> -> vector<8x8xf32>
    %159 = arith.truncf %158 : vector<8x8xf32> to vector<8x8xbf16>
    %c3 = arith.constant 3 : index
    %c0_69 = arith.constant 0 : index
    %c0_70 = arith.constant 0 : index
    %160 = vector.load %arg12[%c3, %c0_69, %c0_70] : memref<4x8x32xbf16, #tpu.memory_space<vmem>>, vector<1x8x32xbf16>
    %161 = vector.shape_cast %160 : vector<1x8x32xbf16> to vector<8x32xbf16>
    %cst_71 = arith.constant dense<0.000000e+00> : vector<8x32xf32>
    %162 = tpu.matmul %159, %161, %cst_71 {dimension_numbers = #tpu.dot_dimension_numbers<[1], [0], [0], [1], [0, 0, 1, 1], [], []>} : vector<8x8xbf16>, vector<8x32xbf16>, vector<8x32xf32> -> vector<8x32xf32>
    %163 = arith.addf %134, %162 : vector<8x32xf32>
    %c0_72 = arith.constant 0 : index
    %c0_73 = arith.constant 0 : index
    %164 = vector.load %arg13[%c0_72, %c0_73] : memref<1x32xf32, #tpu.memory_space<vmem>>, vector<1x32xf32>
    %165 = vector.broadcast %164 : vector<1x32xf32> to vector<8x32xf32>
    %166 = arith.addf %163, %165 : vector<8x32xf32>
    %167 = arith.addf %1, %166 : vector<8x32xf32>
    %c0_74 = arith.constant 0 : index
    %c0_75 = arith.constant 0 : index
    %c0_76 = arith.constant 0 : index
    %168 = vector.load %arg14[%c0_74, %c0_75, %c0_76] : memref<1x8x32xf32, #tpu.memory_space<vmem>>, vector<1x8x32xf32>
    %169 = vector.shape_cast %168 : vector<1x8x32xf32> to vector<8x32xf32>
    %170 = vector.shape_cast %167 : vector<8x32xf32> to vector<1x8x32xf32>
    tpu.vector_store %arg14[%c0_74, %c0_75, %c0_76], %170 {strides = array<i32>} : memref<1x8x32xf32, #tpu.memory_space<vmem>>, vector<1x8x32xf32>,
    return
  }
  func.func @transform_0(%arg0: i32) -> (i32, i32, i32) {
    %c0_i32 = arith.constant 0 : i32
    %c0_i32_0 = arith.constant 0 : i32
    %c0_i32_1 = arith.constant 0 : i32
    return %arg0, %c0_i32, %c0_i32_0 : i32, i32, i32
  }
  func.func @transform_1(%arg0: i32) -> (i32, i32, i32) {
    %c0_i32 = arith.constant 0 : i32
    %c0_i32_0 = arith.constant 0 : i32
    %c0_i32_1 = arith.constant 0 : i32
    return %arg0, %c0_i32, %c0_i32_0 : i32, i32, i32
  }
  func.func @transform_2(%arg0: i32) -> (i32, i32, i32) {
    %c0_i32 = arith.constant 0 : i32
    %c0_i32_0 = arith.constant 0 : i32
    %c0_i32_1 = arith.constant 0 : i32
    return %arg0, %c0_i32, %c0_i32_0 : i32, i32, i32
  }
  func.func @transform_3(%arg0: i32) -> (i32, i32) {
    %c0_i32 = arith.constant 0 : i32
    %c0_i32_0 = arith.constant 0 : i32
    %c0_i32_1 = arith.constant 0 : i32
    return %c0_i32, %c0_i32_0 : i32, i32
  }
  func.func @transform_4(%arg0: i32) -> (i32, i32) {
    %c0_i32 = arith.constant 0 : i32
    %c0_i32_0 = arith.constant 0 : i32
    %c0_i32_1 = arith.constant 0 : i32
    return %c0_i32, %c0_i32_0 : i32, i32
  }
  func.func @transform_5(%arg0: i32) -> (i32, i32) {
    %c0_i32 = arith.constant 0 : i32
    %c0_i32_0 = arith.constant 0 : i32
    %c0_i32_1 = arith.constant 0 : i32
    return %c0_i32, %c0_i32_0 : i32, i32
  }
  func.func @transform_6(%arg0: i32) -> (i32, i32) {
    %c0_i32 = arith.constant 0 : i32
    %c0_i32_0 = arith.constant 0 : i32
    %c0_i32_1 = arith.constant 0 : i32
    return %c0_i32, %c0_i32_0 : i32, i32
  }
  func.func @transform_7(%arg0: i32) -> (i32, i32) {
    %c0_i32 = arith.constant 0 : i32
    %c0_i32_0 = arith.constant 0 : i32
    %c0_i32_1 = arith.constant 0 : i32
    return %c0_i32, %c0_i32_0 : i32, i32
  }
  func.func @transform_8(%arg0: i32) -> (i32, i32) {
    %c0_i32 = arith.constant 0 : i32
    %c0_i32_0 = arith.constant 0 : i32
    %c0_i32_1 = arith.constant 0 : i32
    return %c0_i32, %c0_i32_0 : i32, i32
  }
  func.func @transform_9(%arg0: i32) -> (i32, i32) {
    %c0_i32 = arith.constant 0 : i32
    %c0_i32_0 = arith.constant 0 : i32
    %c0_i32_1 = arith.constant 0 : i32
    return %c0_i32, %c0_i32_0 : i32, i32
  }
  func.func @transform_10(%arg0: i32) -> (i32, i32) {
    %c0_i32 = arith.constant 0 : i32
    %c0_i32_0 = arith.constant 0 : i32
    %c0_i32_1 = arith.constant 0 : i32
    return %c0_i32, %c0_i32_0 : i32, i32
  }
  func.func @transform_11(%arg0: i32) -> (i32, i32, i32) {
    %c0_i32 = arith.constant 0 : i32
    %c0_i32_0 = arith.constant 0 : i32
    %c0_i32_1 = arith.constant 0 : i32
    %c0_i32_2 = arith.constant 0 : i32
    return %c0_i32, %c0_i32_0, %c0_i32_1 : i32, i32, i32
  }
  func.func @transform_12(%arg0: i32) -> (i32, i32) {
    %c0_i32 = arith.constant 0 : i32
    %c0_i32_0 = arith.constant 0 : i32
    %c0_i32_1 = arith.constant 0 : i32
    return %c0_i32, %c0_i32_0 : i32, i32
  }
  func.func @transform_13(%arg0: i32) -> (i32, i32, i32) {
    %c0_i32 = arith.constant 0 : i32
    %c0_i32_0 = arith.constant 0 : i32
    %c0_i32_1 = arith.constant 0 : i32
    return %arg0, %c0_i32, %c0_i32_0 : i32, i32, i32
  }
}

</mosaic_0001>

<llo_original>
// kernel: tpu_custom_call.1
$region0: #{tpu_custom_call.1}
  #allocation0 [shape = 'u32[]', space=smem, size = 0x4, offset = 0x4, fixed_abs, tag = 'smem constant byte address 0x4 - core index']
  #allocation1 [shape = 'u32[144,128]{1,0:T(1,128)}', space=vmem, size = 0x12000, scoped, tag = 'internal scratch']
  %s0 = inlined_call_operand.hbm [shape: f32[2,8,32], index: 0, kind: input, shape index: {}]
  %s1 = inlined_call_operand.hbm [shape: f32[2,8,32], index: 1, kind: input, shape index: {}]
  %s2 = inlined_call_operand.hbm [shape: f32[2,8,8], index: 2, kind: input, shape index: {}]
  %s3 = inlined_call_operand.vmem [shape: f32[1,32], index: 3, kind: input, shape index: {}]
  %s4 = inlined_call_operand.vmem [shape: f32[1,32], index: 4, kind: input, shape index: {}]
  %s5 = inlined_call_operand.vmem [shape: bf16[32,32], index: 5, kind: input, shape index: {}]
  %s6 = inlined_call_operand.hbm [shape: f32[1,32], index: 6, kind: input, shape index: {}]
  %s7 = inlined_call_operand.hbm [shape: bf16[32,32], index: 7, kind: input, shape index: {}]
  %s8 = inlined_call_operand.hbm [shape: f32[1,32], index: 8, kind: input, shape index: {}]
  %s9 = inlined_call_operand.vmem [shape: bf16[32,32], index: 9, kind: input, shape index: {}]
  %s10 = inlined_call_operand.vmem [shape: f32[1,32], index: 10, kind: input, shape index: {}]
  %s11 = inlined_call_operand.hbm [shape: bf16[4,8,32], index: 11, kind: input, shape index: {}]
  %s12 = inlined_call_operand.vmem [shape: f32[1,32], index: 12, kind: input, shape index: {}]
  %s13 = inlined_call_operand.hbm [shape: f32[2,8,32], index: 13, kind: output, shape index: {}]
  %s14 = sld [smem:[#allocation0]]
  $region113: #{tpu_custom_call.1} parent=0
    _
  %s16 = ssub.s32 1, %s14
  %s17 = scalar_select 0, %s16, %s14
  $region1: #{tpu_custom_call.1} parent=0
    #allocation2 [shape = 'u8[8192]{0}', space=vmem, size = 0x2000, scoped, tag = 'input window, operand 0']
    #allocation3 [shape = 's32[2]{0}', space=sflag, size = 0x8, scoped, tag = 'scoped memory for tpu_custom_call.1']
    #allocation4 [shape = 's32[2]{0}', space=sflag, size = 0x8, scoped, tag = 'scoped memory for tpu_custom_call.1']
    #allocation5 [shape = 'u8[8192]{0}', space=vmem, size = 0x2000, scoped, tag = 'input window, operand 1']
    #allocation6 [shape = 's32[2]{0}', space=sflag, size = 0x8, scoped, tag = 'scoped memory for tpu_custom_call.1']
    #allocation7 [shape = 'u8[8192]{0}', space=vmem, size = 0x2000, scoped, tag = 'input window, operand 2']
    #allocation8 [shape = 'u8[512]{0}', space=vmem, size = 0x400, scoped, tag = 'input window, operand 6, single buffered']
    #allocation9 [shape = 's32[1]{0}', space=sflag, size = 0x4, scoped, tag = 'scoped memory for tpu_custom_call.1']
    #allocation10 [shape = 'u8[8192]{0}', space=vmem, size = 0x2000, scoped, tag = 'input window, operand 7, single buffered']
    #allocation11 [shape = 'u8[512]{0}', space=vmem, size = 0x400, scoped, tag = 'input window, operand 8, single buffered']
    #allocation12 [shape = 's32[1]{0}', space=sflag, size = 0x4, scoped, tag = 'scoped memory for tpu_custom_call.1']
    #allocation13 [shape = 'u8[8192]{0}', space=vmem, size = 0x2000, scoped, tag = 'input window, operand 11, single buffered']
    #allocation14 [shape = 'u8[8192]{0}', space=vmem, size = 0x2000, scoped, tag = 'output window, operand 0']
    %18 = vsyncpa [#allocation3], 0
    %s19 = scalar_lea.sflag [#allocation3], 1
    %20 = vsyncpa %s19, 0
    %21 = vsyncpa [#allocation6], 0
    %s22 = scalar_lea.sflag [#allocation6], 1
    %23 = vsyncpa %s22, 0
    %24 = vsyncpa [#allocation9], 0
    %25 = vsyncpa [#allocation12], 0
    %26 = vsyncpa [#allocation4], 0
    %s27 = scalar_lea.sflag [#allocation4], 1
    %28 = vsyncpa %s27, 0
    loop: start=0, step=1, limit=4
    $region2: #{tpu_custom_call.1} parent=1 // loop_pre_header
      _
    $region3: #{tpu_custom_call.1} parent=1 // loop_header
      %s30 = sphi 0, %s34
      %p31 = scmp.ge.s32.totalorder %s30, 4
      %s40 = sphi 0, %s42
      %s43 = sphi 0, %s40
      %s44 = sphi 0, %s43
      %s60 = sphi 0, %s44
      %s66 = sphi 0, %s68
      %s69 = sphi 0, %s66
      %s70 = sphi 0, %s69
      %s86 = sphi 0, %s70
      %s92 = sphi 0, %s94
      %s95 = sphi 0, %s92
      %s96 = sphi 0, %s95
      %s112 = sphi 0, %s96
      %s116 = sphi 0, %s116
      %s118 = sphi 0, %s116
      %s119 = sphi 0, %s118
      %s133 = sphi 0, %s119
      %s137 = sphi 0, %s137
      %s139 = sphi 0, %s137
      %s140 = sphi 0, %s139
      %s154 = sphi 0, %s140
      %s158 = sphi 0, %s158
      %s160 = sphi 0, %s158
      %s161 = sphi 0, %s160
      %s175 = sphi 0, %s161
      %s179 = sphi 0, %s179
      %s181 = sphi 0, %s179
      %s182 = sphi 0, %s181
      %s196 = sphi 0, %s182
      %s200 = sphi 0, %s200
      %s202 = sphi 0, %s200
      %s203 = sphi 0, %s202
      %s217 = sphi 0, %s203
      %s221 = sphi 0, %s221
      %s223 = sphi 0, %s221
      %s224 = sphi 0, %s223
      %s238 = sphi 0, %s224
      %s242 = sphi 0, %s242
      %s244 = sphi 0, %s242
      %s245 = sphi 0, %s244
      %s259 = sphi 0, %s245
      %s263 = sphi 0, %s263
      %s265 = sphi 0, %s263
      %s266 = sphi 0, %s265
      %s280 = sphi 0, %s266
      %s284 = sphi 0, %s284
      %s286 = sphi 0, %s284
      %s287 = sphi 0, %s286
      %s301 = sphi 0, %s287
      %s305 = sphi 0, %s305
      %s307 = sphi 0, %s305
      %s308 = sphi 0, %s307
      %s322 = sphi 0, %s308
      %s328 = sphi 0, %s330
      %s331 = sphi 0, %s328
      %s332 = sphi 0, %s331
      %s348 = sphi 0, %s332
    $region4: #{tpu_custom_call.1} parent=1 // loop_header_branch
      %33 = sbr.rel (%p31) target = $region8
    $region5: #{tpu_custom_call.1} parent=1 // loop_body
      %s35 = ssub.s32 %s30, 1
      %s36 = ssub.s32 %s30, 2
      %s37 = sadd.s32 %s30, 1
      %s38 = ssub.s32 %s30, %s37
      %p39 = scmp.eq.s32.totalorder %s38, 0
      %s41 = sadd.s32 %s40, 1
      %s42 = scalar_select %p39, %s40, %s41
      %p45 = pneg %p39
      %p46 = scmp.eq.s32.totalorder %s30, 1
      %p47 = por %p45, %p46
      %p48 = scmp.ne.s32.totalorder %s40, %s43
      %p49 = scmp.eq.s32.totalorder %s30, 0
      %p50 = por %p48, %p49
      %p51 = scmp.ne.s32.totalorder %s40, %s43
      %p52 = scmp.eq.s32.totalorder %s35, 1
      %p53 = por %p51, %p52
      %p54 = scmp.ne.s32.totalorder %s43, %s44
      %p55 = scmp.eq.s32.totalorder %s35, 0
      %p56 = por %p54, %p55
      %p57 = scmp.ne.s32.totalorder %s43, %s44
      %p58 = scmp.eq.s32.totalorder %s36, 1
      %p59 = por %p57, %p58
      %p61 = scmp.ne.s32.totalorder %s44, %s60
      %p62 = scmp.eq.s32.totalorder %s36, 0
      %p63 = por %p61, %p62
      %s64 = ssub.s32 %s30, %s37
      %p65 = scmp.eq.s32.totalorder %s64, 0
      %s67 = sadd.s32 %s66, 1
      %s68 = scalar_select %p65, %s66, %s67
      %p71 = pneg %p65
      %p72 = scmp.eq.s32.totalorder %s30, 1
      %p73 = por %p71, %p72
      %p74 = scmp.ne.s32.totalorder %s66, %s69
      %p75 = scmp.eq.s32.totalorder %s30, 0
      %p76 = por %p74, %p75
      %p77 = scmp.ne.s32.totalorder %s66, %s69
      %p78 = scmp.eq.s32.totalorder %s35, 1
      %p79 = por %p77, %p78
      %p80 = scmp.ne.s32.totalorder %s69, %s70
      %p81 = scmp.eq.s32.totalorder %s35, 0
      %p82 = por %p80, %p81
      %p83 = scmp.ne.s32.totalorder %s69, %s70
      %p84 = scmp.eq.s32.totalorder %s36, 1
      %p85 = por %p83, %p84
      %p87 = scmp.ne.s32.totalorder %s70, %s86
      %p88 = scmp.eq.s32.totalorder %s36, 0
      %p89 = por %p87, %p88
      %s90 = ssub.s32 %s30, %s37
      %p91 = scmp.eq.s32.totalorder %s90, 0
      %s93 = sadd.s32 %s92, 1
      %s94 = scalar_select %p91, %s92, %s93
      %p97 = pneg %p91
      %p98 = scmp.eq.s32.totalorder %s30, 1
      %p99 = por %p97, %p98
      %p100 = scmp.ne.s32.totalorder %s92, %s95
      %p101 = scmp.eq.s32.totalorder %s30, 0
      %p102 = por %p100, %p101
      %p103 = scmp.ne.s32.totalorder %s92, %s95
      %p104 = scmp.eq.s32.totalorder %s35, 1
      %p105 = por %p103, %p104
      %p106 = scmp.ne.s32.totalorder %s95, %s96
      %p107 = scmp.eq.s32.totalorder %s35, 0
      %p108 = por %p106, %p107
      %p109 = scmp.ne.s32.totalorder %s95, %s96
      %p110 = scmp.eq.s32.totalorder %s36, 1
      %p111 = por %p109, %p110
      %p113 = scmp.ne.s32.totalorder %s96, %s112
      %p114 = scmp.eq.s32.totalorder %s36, 0
      %p115 = por %p113, %p114
      %s117 = sadd.s32 %s116, 1
      %p120 = scmp.eq.s32.totalorder %s30, 1
      %p121 = scmp.ne.s32.totalorder %s116, %s118
      %p122 = scmp.eq.s32.totalorder %s30, 0
      %p123 = por %p121, %p122
      %p124 = scmp.ne.s32.totalorder %s116, %s118
      %p125 = scmp.eq.s32.totalorder %s35, 1
      %p126 = por %p124, %p125
      %p127 = scmp.ne.s32.totalorder %s118, %s119
      %p128 = scmp.eq.s32.totalorder %s35, 0
      %p129 = por %p127, %p128
      %p130 = scmp.ne.s32.totalorder %s118, %s119
      %p131 = scmp.eq.s32.totalorder %s36, 1
      %p132 = por %p130, %p131
      %p134 = scmp.ne.s32.totalorder %s119, %s133
      %p135 = scmp.eq.s32.totalorder %s36, 0
      %p136 = por %p134, %p135
      %s138 = sadd.s32 %s137, 1
      %p141 = scmp.eq.s32.totalorder %s30, 1
      %p142 = scmp.ne.s32.totalorder %s137, %s139
      %p143 = scmp.eq.s32.totalorder %s30, 0
      %p144 = por %p142, %p143
      %p145 = scmp.ne.s32.totalorder %s137, %s139
      %p146 = scmp.eq.s32.totalorder %s35, 1
      %p147 = por %p145, %p146
      %p148 = scmp.ne.s32.totalorder %s139, %s140
      %p149 = scmp.eq.s32.totalorder %s35, 0
      %p150 = por %p148, %p149
      %p151 = scmp.ne.s32.totalorder %s139, %s140
      %p152 = scmp.eq.s32.totalorder %s36, 1
      %p153 = por %p151, %p152
      %p155 = scmp.ne.s32.totalorder %s140, %s154
      %p156 = scmp.eq.s32.totalorder %s36, 0
      %p157 = por %p155, %p156
      %s159 = sadd.s32 %s158, 1
      %p162 = scmp.eq.s32.totalorder %s30, 1
      %p163 = scmp.ne.s32.totalorder %s158, %s160
      %p164 = scmp.eq.s32.totalorder %s30, 0
      %p165 = por %p163, %p164
      %p166 = scmp.ne.s32.totalorder %s158, %s160
      %p167 = scmp.eq.s32.totalorder %s35, 1
      %p168 = por %p166, %p167
      %p169 = scmp.ne.s32.totalorder %s160, %s161
      %p170 = scmp.eq.s32.totalorder %s35, 0
      %p171 = por %p169, %p170
      %p172 = scmp.ne.s32.totalorder %s160, %s161
      %p173 = scmp.eq.s32.totalorder %s36, 1
      %p174 = por %p172, %p173
      %p176 = scmp.ne.s32.totalorder %s161, %s175
      %p177 = scmp.eq.s32.totalorder %s36, 0
      %p178 = por %p176, %p177
      %s180 = sadd.s32 %s179, 1
      %p183 = scmp.eq.s32.totalorder %s30, 1
      %p184 = scmp.ne.s32.totalorder %s179, %s181
      %p185 = scmp.eq.s32.totalorder %s30, 0
      %p186 = por %p184, %p185
      %p187 = scmp.ne.s32.totalorder %s179, %s181
      %p188 = scmp.eq.s32.totalorder %s35, 1
      %p189 = por %p187, %p188
      %p190 = scmp.ne.s32.totalorder %s181, %s182
      %p191 = scmp.eq.s32.totalorder %s35, 0
      %p192 = por %p190, %p191
      %p193 = scmp.ne.s32.totalorder %s181, %s182
      %p194 = scmp.eq.s32.totalorder %s36, 1
      %p195 = por %p193, %p194
      %p197 = scmp.ne.s32.totalorder %s182, %s196
      %p198 = scmp.eq.s32.totalorder %s36, 0
      %p199 = por %p197, %p198
      %s201 = sadd.s32 %s200, 1
      %p204 = scmp.eq.s32.totalorder %s30, 1
      %p205 = scmp.ne.s32.totalorder %s200, %s202
      %p206 = scmp.eq.s32.totalorder %s30, 0
      %p207 = por %p205, %p206
      %p208 = scmp.ne.s32.totalorder %s200, %s202
      %p209 = scmp.eq.s32.totalorder %s35, 1
      %p210 = por %p208, %p209
      %p211 = scmp.ne.s32.totalorder %s202, %s203
      %p212 = scmp.eq.s32.totalorder %s35, 0
      %p213 = por %p211, %p212
      %p214 = scmp.ne.s32.totalorder %s202, %s203
      %p215 = scmp.eq.s32.totalorder %s36, 1
      %p216 = por %p214, %p215
      %p218 = scmp.ne.s32.totalorder %s203, %s217
      %p219 = scmp.eq.s32.totalorder %s36, 0
      %p220 = por %p218, %p219
      %s222 = sadd.s32 %s221, 1
      %p225 = scmp.eq.s32.totalorder %s30, 1
      %p226 = scmp.ne.s32.totalorder %s221, %s223
      %p227 = scmp.eq.s32.totalorder %s30, 0
      %p228 = por %p226, %p227
      %p229 = scmp.ne.s32.totalorder %s221, %s223
      %p230 = scmp.eq.s32.totalorder %s35, 1
      %p231 = por %p229, %p230
      %p232 = scmp.ne.s32.totalorder %s223, %s224
      %p233 = scmp.eq.s32.totalorder %s35, 0
      %p234 = por %p232, %p233
      %p235 = scmp.ne.s32.totalorder %s223, %s224
      %p236 = scmp.eq.s32.totalorder %s36, 1
      %p237 = por %p235, %p236
      %p239 = scmp.ne.s32.totalorder %s224, %s238
      %p240 = scmp.eq.s32.totalorder %s36, 0
      %p241 = por %p239, %p240
      %s243 = sadd.s32 %s242, 1
      %p246 = scmp.eq.s32.totalorder %s30, 1
      %p247 = scmp.ne.s32.totalorder %s242, %s244
      %p248 = scmp.eq.s32.totalorder %s30, 0
      %p249 = por %p247, %p248
      %p250 = scmp.ne.s32.totalorder %s242, %s244
      %p251 = scmp.eq.s32.totalorder %s35, 1
      %p252 = por %p250, %p251
      %p253 = scmp.ne.s32.totalorder %s244, %s245
      %p254 = scmp.eq.s32.totalorder %s35, 0
      %p255 = por %p253, %p254
      %p256 = scmp.ne.s32.totalorder %s244, %s245
      %p257 = scmp.eq.s32.totalorder %s36, 1
      %p258 = por %p256, %p257
      %p260 = scmp.ne.s32.totalorder %s245, %s259
      %p261 = scmp.eq.s32.totalorder %s36, 0
      %p262 = por %p260, %p261
      %s264 = sadd.s32 %s263, 1
      %p267 = scmp.eq.s32.totalorder %s30, 1
      %p268 = scmp.ne.s32.totalorder %s263, %s265
      %p269 = scmp.eq.s32.totalorder %s30, 0
      %p270 = por %p268, %p269
      %p271 = scmp.ne.s32.totalorder %s263, %s265
      %p272 = scmp.eq.s32.totalorder %s35, 1
      %p273 = por %p271, %p272
      %p274 = scmp.ne.s32.totalorder %s265, %s266
      %p275 = scmp.eq.s32.totalorder %s35, 0
      %p276 = por %p274, %p275
      %p277 = scmp.ne.s32.totalorder %s265, %s266
      %p278 = scmp.eq.s32.totalorder %s36, 1
      %p279 = por %p277, %p278
      %p281 = scmp.ne.s32.totalorder %s266, %s280
      %p282 = scmp.eq.s32.totalorder %s36, 0
      %p283 = por %p281, %p282
      %s285 = sadd.s32 %s284, 1
      %p288 = scmp.eq.s32.totalorder %s30, 1
      %p289 = scmp.ne.s32.totalorder %s284, %s286
      %p290 = scmp.eq.s32.totalorder %s30, 0
      %p291 = por %p289, %p290
      %p292 = scmp.ne.s32.totalorder %s284, %s286
      %p293 = scmp.eq.s32.totalorder %s35, 1
      %p294 = por %p292, %p293
      %p295 = scmp.ne.s32.totalorder %s286, %s287
      %p296 = scmp.eq.s32.totalorder %s35, 0
      %p297 = por %p295, %p296
      %p298 = scmp.ne.s32.totalorder %s286, %s287
      %p299 = scmp.eq.s32.totalorder %s36, 1
      %p300 = por %p298, %p299
      %p302 = scmp.ne.s32.totalorder %s287, %s301
      %p303 = scmp.eq.s32.totalorder %s36, 0
      %p304 = por %p302, %p303
      %s306 = sadd.s32 %s305, 1
      %p309 = scmp.eq.s32.totalorder %s30, 1
      %p310 = scmp.ne.s32.totalorder %s305, %s307
      %p311 = scmp.eq.s32.totalorder %s30, 0
      %p312 = por %p310, %p311
      %p313 = scmp.ne.s32.totalorder %s305, %s307
      %p314 = scmp.eq.s32.totalorder %s35, 1
      %p315 = por %p313, %p314
      %p316 = scmp.ne.s32.totalorder %s307, %s308
      %p317 = scmp.eq.s32.totalorder %s35, 0
      %p318 = por %p316, %p317
      %p319 = scmp.ne.s32.totalorder %s307, %s308
      %p320 = scmp.eq.s32.totalorder %s36, 1
      %p321 = por %p319, %p320
      %p323 = scmp.ne.s32.totalorder %s308, %s322
      %p324 = scmp.eq.s32.totalorder %s36, 0
      %p325 = por %p323, %p324
      %s326 = ssub.s32 %s30, %s37
      %p327 = scmp.eq.s32.totalorder %s326, 0
      %s329 = sadd.s32 %s328, 1
      %s330 = scalar_select %p327, %s328, %s329
      %p333 = pneg %p327
      %p334 = scmp.eq.s32.totalorder %s30, 1
      %p335 = por %p333, %p334
      %p336 = scmp.ne.s32.totalorder %s328, %s331
      %p337 = scmp.eq.s32.totalorder %s30, 0
      %p338 = por %p336, %p337
      %p339 = scmp.ne.s32.totalorder %s328, %s331
      %p340 = scmp.eq.s32.totalorder %s35, 1
      %p341 = por %p339, %p340
      %p342 = scmp.ne.s32.totalorder %s331, %s332
      %p343 = scmp.eq.s32.totalorder %s35, 0
      %p344 = por %p342, %p343
      %p345 = scmp.ne.s32.totalorder %s331, %s332
      %p346 = scmp.eq.s32.totalorder %s36, 1
      %p347 = por %p345, %p346
      %p349 = scmp.ne.s32.totalorder %s332, %s348
      %p350 = scmp.eq.s32.totalorder %s36, 0
      %p351 = por %p349, %p350
      %p352 = scmp.le.s32.totalorder 1, %s30
      %p353 = scmp.lt.s32.totalorder %s30, 3
      %p354 = pnand %p352, %p353
      %p355 = pneg %p354
      // Predicated region
      $region9: #{tpu_custom_call.1} parent=5 // pred_check
        _
      $region10: #{tpu_custom_call.1} parent=5 // pred_check_branch
        %357 = sbr.rel (%p354) target = $region12
      $region11: #{tpu_custom_call.1} parent=5 // pred_region
        %s358 = ssub.s32 %s30, 1
        // Predicated region
        $region13: #{tpu_custom_call.1} parent=11 // pred_check
          %p359 = pneg %p129
        $region14: #{tpu_custom_call.1} parent=11 // pred_check_branch
          %361 = sbr.rel (%p359) target = $region16
        $region15: #{tpu_custom_call.1} parent=11 // pred_region
          _
        $region16: #{tpu_custom_call.1} parent=11 // pred_fallthru
          _
        // Predicated region
        $region17: #{tpu_custom_call.1} parent=11 // pred_check
          %p362 = pneg %p150
        $region18: #{tpu_custom_call.1} parent=11 // pred_check_branch
          %364 = sbr.rel (%p362) target = $region20
        $region19: #{tpu_custom_call.1} parent=11 // pred_region
          _
        $region20: #{tpu_custom_call.1} parent=11 // pred_fallthru
          _
        // Predicated region
        $region21: #{tpu_custom_call.1} parent=11 // pred_check
          %p365 = pneg %p171
        $region22: #{tpu_custom_call.1} parent=11 // pred_check_branch
          %367 = sbr.rel (%p365) target = $region24
        $region23: #{tpu_custom_call.1} parent=11 // pred_region
          _
        $region24: #{tpu_custom_call.1} parent=11 // pred_fallthru
          _
        // Predicated region
        $region25: #{tpu_custom_call.1} parent=11 // pred_check
          %p368 = pneg %p192
        $region26: #{tpu_custom_call.1} parent=11 // pred_check_branch
          %370 = sbr.rel (%p368) target = $region28
        $region27: #{tpu_custom_call.1} parent=11 // pred_region
          %s372 = ssub.s32 16, 16
          %373 = vsyncadd [#allocation9], %s372
          %s375 = sshll.u32 [#allocation8], 4
          %s376 = int_to_ptr.vmem [resolvable:$true] %s375
          %378 = dma.hbm_to_vmem [thread:$0]  %s6, 16, %s376, [#allocation9]
        $region28: #{tpu_custom_call.1} parent=11 // pred_fallthru
          _
        // Predicated region
        $region29: #{tpu_custom_call.1} parent=11 // pred_check
          %p379 = pneg %p213
        $region30: #{tpu_custom_call.1} parent=11 // pred_check_branch
          %381 = sbr.rel (%p379) target = $region32
        $region31: #{tpu_custom_call.1} parent=11 // pred_region
          %s383 = ssub.s32 256, 256
          %384 = vsyncadd [#allocation9], %s383
          %s385 = sshll.u32 [#allocation10], 4
          %s386 = int_to_ptr.vmem [resolvable:$true] %s385
          %391 = dma.hbm_to_vmem [thread:$0]  %s7, 256, %s386, [#allocation9], 64, 64, 4
        $region32: #{tpu_custom_call.1} parent=11 // pred_fallthru
          _
        // Predicated region
        $region33: #{tpu_custom_call.1} parent=11 // pred_check
          %p392 = pneg %p234
        $region34: #{tpu_custom_call.1} parent=11 // pred_check_branch
          %394 = sbr.rel (%p392) target = $region36
        $region35: #{tpu_custom_call.1} parent=11 // pred_region
          %s396 = ssub.s32 16, 16
          %397 = vsyncadd [#allocation12], %s396
          %s399 = sshll.u32 [#allocation11], 4
          %s400 = int_to_ptr.vmem [resolvable:$true] %s399
          %402 = dma.hbm_to_vmem [thread:$0]  %s8, 16, %s400, [#allocation12]
        $region36: #{tpu_custom_call.1} parent=11 // pred_fallthru
          _
        // Predicated region
        $region37: #{tpu_custom_call.1} parent=11 // pred_check
          %p403 = pneg %p255
        $region38: #{tpu_custom_call.1} parent=11 // pred_check_branch
          %405 = sbr.rel (%p403) target = $region40
        $region39: #{tpu_custom_call.1} parent=11 // pred_region
          _
        $region40: #{tpu_custom_call.1} parent=11 // pred_fallthru
          _
        // Predicated region
        $region41: #{tpu_custom_call.1} parent=11 // pred_check
          %p406 = pneg %p276
        $region42: #{tpu_custom_call.1} parent=11 // pred_check_branch
          %408 = sbr.rel (%p406) target = $region44
        $region43: #{tpu_custom_call.1} parent=11 // pred_region
          _
        $region44: #{tpu_custom_call.1} parent=11 // pred_fallthru
          _
        // Predicated region
        $region45: #{tpu_custom_call.1} parent=11 // pred_check
          %p409 = pneg %p297
        $region46: #{tpu_custom_call.1} parent=11 // pred_check_branch
          %411 = sbr.rel (%p409) target = $region48
        $region47: #{tpu_custom_call.1} parent=11 // pred_region
          %s413 = ssub.s32 256, 256
          %414 = vsyncadd [#allocation12], %s413
          %s415 = sshll.u32 [#allocation13], 4
          %s416 = int_to_ptr.vmem [resolvable:$true] %s415
          %421 = dma.hbm_to_vmem [thread:$0]  %s11, 256, %s416, [#allocation12], 64, 64, 4
        $region48: #{tpu_custom_call.1} parent=11 // pred_fallthru
          _
        // Predicated region
        $region49: #{tpu_custom_call.1} parent=11 // pred_check
          %p422 = pneg %p318
        $region50: #{tpu_custom_call.1} parent=11 // pred_check_branch
          %424 = sbr.rel (%p422) target = $region52
        $region51: #{tpu_custom_call.1} parent=11 // pred_region
          _
        $region52: #{tpu_custom_call.1} parent=11 // pred_fallthru
          _
      $region12: #{tpu_custom_call.1} parent=5 // pred_fallthru
        _
      %p425 = scmp.lt.s32.totalorder %s30, 2
      // Predicated region
      $region53: #{tpu_custom_call.1} parent=5 // pred_check
        %p426 = pneg %p425
      $region54: #{tpu_custom_call.1} parent=5 // pred_check_branch
        %428 = sbr.rel (%p426) target = $region56
      $region55: #{tpu_custom_call.1} parent=5 // pred_region
        // Predicated region
        $region57: #{tpu_custom_call.1} parent=55 // pred_check
          %p429 = pneg %p50
        $region58: #{tpu_custom_call.1} parent=55 // pred_check_branch
          %431 = sbr.rel (%p429) target = $region60
        $region59: #{tpu_custom_call.1} parent=55 // pred_region
          %s432 = sand.u32 %s40, 1
          %s433 = scalar_lea.sflag [#allocation3], %s432
          %s434 = sand.u32 %s40, 1
          %s435 = smul.addr %s434, 8
          %s436 = scalar_lea.vmem [#allocation2], %s435
          %s438 = ssub.s32 128, 128
          %439 = vsyncadd %s433, %s438
          %s440 = smul.addr %s30, 128
          %s441 = scalar_lea.hbm %s0, %s440
          %s443 = sshll.u32 %s436, 4
          %s444 = int_to_ptr.vmem [resolvable:$true] %s443
          %446 = dma.hbm_to_vmem [thread:$0]  %s441, 128, %s444, %s433
        $region60: #{tpu_custom_call.1} parent=55 // pred_fallthru
          _
        // Predicated region
        $region61: #{tpu_custom_call.1} parent=55 // pred_check
          %p447 = pneg %p76
        $region62: #{tpu_custom_call.1} parent=55 // pred_check_branch
          %449 = sbr.rel (%p447) target = $region64
        $region63: #{tpu_custom_call.1} parent=55 // pred_region
          %s450 = sand.u32 %s30, 1
          %s451 = scalar_lea.sflag [#allocation6], %s450
          %s452 = sand.u32 %s66, 1
          %s453 = smul.addr %s452, 8
          %s454 = scalar_lea.vmem [#allocation5], %s453
          %s456 = ssub.s32 128, 128
          %457 = vsyncadd %s451, %s456
          %s458 = smul.addr %s30, 128
          %s459 = scalar_lea.hbm %s1, %s458
          %s461 = sshll.u32 %s454, 4
          %s462 = int_to_ptr.vmem [resolvable:$true] %s461
          %464 = dma.hbm_to_vmem [thread:$0]  %s459, 128, %s462, %s451
        $region64: #{tpu_custom_call.1} parent=55 // pred_fallthru
          _
        // Predicated region
        $region65: #{tpu_custom_call.1} parent=55 // pred_check
          %p465 = pneg %p102
        $region66: #{tpu_custom_call.1} parent=55 // pred_check_branch
          %467 = sbr.rel (%p465) target = $region68
        $region67: #{tpu_custom_call.1} parent=55 // pred_region
          %s468 = sand.u32 %s30, 1
          %s469 = scalar_lea.sflag [#allocation6], %s468
          %s470 = sand.u32 %s92, 1
          %s471 = smul.addr %s470, 8
          %s472 = scalar_lea.vmem [#allocation7], %s471
          %s474 = ssub.s32 128, 128
          %475 = vsyncadd %s469, %s474
          %s476 = smul.addr %s30, 128
          %s477 = scalar_lea.hbm %s2, %s476
          %s479 = sshll.u32 %s472, 4
          %s480 = int_to_ptr.vmem [resolvable:$true] %s479
          %482 = dma.hbm_to_vmem [thread:$0]  %s477, 128, %s480, %s469
        $region68: #{tpu_custom_call.1} parent=55 // pred_fallthru
          _
      $region56: #{tpu_custom_call.1} parent=5 // pred_fallthru
        _
      %p483 = scmp.le.s32.totalorder 1, %s30
      %p484 = scmp.lt.s32.totalorder %s30, 3
      %p485 = pnand %p483, %p484
      %p486 = pneg %p485
      // Predicated region
      $region69: #{tpu_custom_call.1} parent=5 // pred_check
        _
      $region70: #{tpu_custom_call.1} parent=5 // pred_check_branch
        %488 = sbr.rel (%p485) target = $region72
      $region71: #{tpu_custom_call.1} parent=5 // pred_region
        %s489 = ssub.s32 %s30, 1
        %s490 = sand.u32 %s43, 1
        %s491 = scalar_lea.sflag [#allocation3], %s490
        %s492 = sand.u32 %s43, 1
        %s493 = smul.addr %s492, 8
        %s494 = scalar_lea.vmem [#allocation2], %s493
        // Predicated region
        $region73: #{tpu_custom_call.1} parent=71 // pred_check
          %p495 = pneg %p56
        $region74: #{tpu_custom_call.1} parent=71 // pred_check_branch
          %497 = sbr.rel (%p495) target = $region76
        $region75: #{tpu_custom_call.1} parent=71 // pred_region
          %498 = dma.done %s491, 128
        $region76: #{tpu_custom_call.1} parent=71 // pred_fallthru
          _
        %s499 = sand.u32 %s35, 1
        %s500 = scalar_lea.sflag [#allocation6], %s499
        %s501 = sand.u32 %s69, 1
        %s502 = smul.addr %s501, 8
        %s503 = scalar_lea.vmem [#allocation5], %s502
        // Predicated region
        $region77: #{tpu_custom_call.1} parent=71 // pred_check
          %p504 = pneg %p82
        $region78: #{tpu_custom_call.1} parent=71 // pred_check_branch
          %506 = sbr.rel (%p504) target = $region80
        $region79: #{tpu_custom_call.1} parent=71 // pred_region
          %507 = dma.done %s500, 128
        $region80: #{tpu_custom_call.1} parent=71 // pred_fallthru
          _
        %s508 = sand.u32 %s35, 1
        %s509 = scalar_lea.sflag [#allocation6], %s508
        %s510 = sand.u32 %s95, 1
        %s511 = smul.addr %s510, 8
        %s512 = scalar_lea.vmem [#allocation7], %s511
        // Predicated region
        $region81: #{tpu_custom_call.1} parent=71 // pred_check
          %p513 = pneg %p108
        $region82: #{tpu_custom_call.1} parent=71 // pred_check_branch
          %515 = sbr.rel (%p513) target = $region84
        $region83: #{tpu_custom_call.1} parent=71 // pred_region
          %516 = dma.done %s509, 128
        $region84: #{tpu_custom_call.1} parent=71 // pred_fallthru
          _
        // Predicated region
        $region85: #{tpu_custom_call.1} parent=71 // pred_check
          %p517 = pneg %p192
        $region86: #{tpu_custom_call.1} parent=71 // pred_check_branch
          %519 = sbr.rel (%p517) target = $region88
        $region87: #{tpu_custom_call.1} parent=71 // pred_region
          %520 = dma.done [#allocation9], 16
        $region88: #{tpu_custom_call.1} parent=71 // pred_fallthru
          _
        // Predicated region
        $region89: #{tpu_custom_call.1} parent=71 // pred_check
          %p521 = pneg %p213
        $region90: #{tpu_custom_call.1} parent=71 // pred_check_branch
          %523 = sbr.rel (%p521) target = $region92
        $region91: #{tpu_custom_call.1} parent=71 // pred_region
          %524 = dma.done [#allocation9], 256
        $region92: #{tpu_custom_call.1} parent=71 // pred_fallthru
          _
        // Predicated region
        $region93: #{tpu_custom_call.1} parent=71 // pred_check
          %p525 = pneg %p234
        $region94: #{tpu_custom_call.1} parent=71 // pred_check_branch
          %527 = sbr.rel (%p525) target = $region96
        $region95: #{tpu_custom_call.1} parent=71 // pred_region
          %528 = dma.done [#allocation12], 16
        $region96: #{tpu_custom_call.1} parent=71 // pred_fallthru
          _
        // Predicated region
        $region97: #{tpu_custom_call.1} parent=71 // pred_check
          %p529 = pneg %p297
        $region98: #{tpu_custom_call.1} parent=71 // pred_check_branch
          %531 = sbr.rel (%p529) target = $region100
        $region99: #{tpu_custom_call.1} parent=71 // pred_region
          %532 = dma.done [#allocation12], 256
        $region100: #{tpu_custom_call.1} parent=71 // pred_fallthru
          _
        %s533 = sand.u32 %s43, 1
        %s534 = scalar_lea.sflag [#allocation3], %s533
        %s535 = sand.u32 %s43, 1
        %s536 = smul.addr %s535, 8
        %s537 = scalar_lea.vmem [#allocation2], %s536
        %p538 = pneg %p56
        %p539 = pneg %p53
        %s540 = sand.u32 %s35, 1
        %s541 = scalar_lea.sflag [#allocation6], %s540
        %s542 = sand.u32 %s69, 1
        %s543 = smul.addr %s542, 8
        %s544 = scalar_lea.vmem [#allocation5], %s543
        %p545 = pneg %p82
        %p546 = pneg %p79
        %s547 = sand.u32 %s35, 1
        %s548 = scalar_lea.sflag [#allocation6], %s547
        %s549 = sand.u32 %s95, 1
        %s550 = smul.addr %s549, 8
        %s551 = scalar_lea.vmem [#allocation7], %s550
        %p552 = pneg %p108
        %p553 = pneg %p105
        %p554 = pneg %p129
        %p555 = pneg %p126
        %p556 = pneg %p150
        %p557 = pneg %p147
        %p558 = pneg %p171
        %p559 = pneg %p168
        %p560 = pneg %p192
        %p561 = pneg %p189
        %p562 = pneg %p213
        %p563 = pneg %p210
        %p564 = pneg %p234
        %p565 = pneg %p231
        %p566 = pneg %p255
        %p567 = pneg %p252
        %p568 = pneg %p276
        %p569 = pneg %p273
        %p570 = pneg %p297
        %p571 = pneg %p294
        %p572 = pneg %p318
        %p573 = pneg %p315
        %p574 = pneg %p344
        %p575 = pneg %p341
        %s576 = sand.u32 %s331, 1
        %s577 = scalar_lea.sflag [#allocation4], %s576
        %s578 = sand.u32 %s331, 1
        %s579 = smul.addr %s578, 8
        %s580 = scalar_lea.vmem [#allocation14], %s579
        %v582 = vld [vmem:[%s494] sm:$0xff]
        %v583 = vld [vmem:[%s512] sm:$0xff]
        %v584 = vld [vmem:[%s3] sm:$0x1]
        %v585 = vld [vmem:[%s4] sm:$0x1]
        %vm586 = vcmask 261120
        %v587 = vsel %vm586, %v582, 0.0
        %588 = vadd.xlane.f32.xlu0 %v587
        %v589 = vpop.xlane.xlu0 %588
        %v590 = vrcp.pop 32.0
        %v591 = vmul.f32 %v589, %v590
        %v592 = vsub.f32 %v582, %v591
        %v593 = vmul.f32 %v592, %v592
        %v594 = vsel %vm586, %v593, 0.0
        %595 = vadd.xlane.f32.xlu0 %v594
        %v596 = vpop.xlane.xlu0 %595
        %v597 = vrcp.pop 31.0
        %v598 = vmul.f32 %v596, %v597
        %v599 = vrsqrt.pop %v598
        %v600 = vmul.f32 %v598, %v599
        %vm601 = vcmp.eq.f32.partialorder %v598, inf
        %v602 = vsel %vm601, %v598, %v600
        %vm603 = vcmp.eq.f32.partialorder %v598, 0.0
        %v604 = vand.u32 %v598, 2147483648
        %v605 = vsel %vm603, %v604, %v602
        %v606 = vadd.f32 %v605, 1e-06
        %v607 = vrcp.pop %v606
        %v608 = vmul.f32 1.0, %v607
        %v609 = vmul.f32 %v592, %v608
        %v611 = vlaneseq
        %v612 = vshrl.u32 %v611, 7
        %v613 = vsub.s32 0, %v612
        %v614 = vrot.slane %v584, %v613
        %v616 = vmul.f32 %v609, %v614
        %v618 = vlaneseq
        %v619 = vshrl.u32 %v618, 7
        %v620 = vsub.s32 0, %v619
        %v621 = vrot.slane %v585, %v620
        %v623 = vadd.f32 %v616, %v621
        %v624 = vpack.c.bf16 %v623, %v623
        %v625 = vld [vmem:[%s5] sm:$0xf]
        %v626 = vld [vmem:[%s5 + $0x4] sm:$0xf]
        %v627 = vld [vmem:[%s5 + $0x8] sm:$0xf]
        %v628 = vld [vmem:[%s5 + $0xc] sm:$0xf]
        %v629 = vld [vmem:[#allocation8] sm:$0x1]
        %v631 = vlaneseq
        %v632 = vshrl.u32 %v631, 7
        %v633 = vsub.s32 0, %v632
        %v634 = vrot.slane %v629, %v633
        %v640 = vunpack.c.l.b16 %v625
        %v641 = vunpack.c.l.b16 %v626
        %v642 = vunpack.c.l.b16 %v627
        %v643 = vunpack.c.l.b16 %v628
        %v644 = vpack.c.b16 %v641, %v640
        %v645 = vpack.c.b16 %v643, %v642
        %v649 = vsel %vm586, %v624, 0
        %651 = vmatprep.subr.bf16.mxu0 0
        %652 = vmatpush1.bf16.msra.mxu0 %v644
        %653 = vmatprep.subr.bf16.mxu0 0
        %654 = vmatpush1.bf16.msra.mxu0 %v645
        %655 = vmatprep.subr.bf16.mxu0 0
        %656 = vmatpush1.bf16.msra.mxu0 0
        %657 = vmatprep.subr.bf16.mxu0 0
        %658 = vmatpush1.bf16.msra.mxu0 0
        %659 = vmatprep.subr.bf16.mxu0 0
        %660 = vmatpush1.bf16.msra.mxu0 0
        %661 = vmatprep.subr.bf16.mxu0 0
        %662 = vmatpush1.bf16.msra.mxu0 0
        %663 = vmatprep.subr.bf16.mxu0 0
        %664 = vmatpush1.bf16.msra.mxu0 0
        %665 = vmatprep.subr.bf16.mxu0 0
        %666 = vmatpush1.bf16.msra.mxu0 0
        %667 = vmatprep.subr.bf16.mxu0 0
        %668 = vmatpush1.bf16.msra.mxu0 0
        %669 = vmatprep.subr.bf16.mxu0 0
        %670 = vmatpush1.bf16.msra.mxu0 0
        %671 = vmatprep.subr.bf16.mxu0 0
        %672 = vmatpush1.bf16.msra.mxu0 0
        %673 = vmatprep.subr.bf16.mxu0 0
        %674 = vmatpush1.bf16.msra.mxu0 0
        %675 = vmatprep.subr.bf16.mxu0 0
        %676 = vmatpush1.bf16.msra.mxu0 0
        %677 = vmatprep.subr.bf16.mxu0 0
        %678 = vmatpush1.bf16.msra.mxu0 0
        %679 = vmatprep.subr.bf16.mxu0 0
        %680 = vmatpush1.bf16.msra.mxu0 0
        %681 = vmatprep.subr.bf16.mxu0 0
        %682 = vmatpush1.bf16.msra.mxu0 0
        %683 = vmatprep.mubr.bf16.mxu0 0
        %684 = vmatmul.mubr.bf16.gmra.mrb[0].mxu0 %v649
        %v685 = vpop.f32.mrb[0].mxu0
        %v686 = vadd.f32 %v634, %v685
        %v687 = vpop.f32.mrb[0].mxu0
        %v688 = vpop.f32.mrb[0].mxu0
        %v689 = vpop.f32.mrb[0].mxu0
        %690 = vdwg.mxu0
        %v691 = vld [vmem:[#allocation10] sm:$0xf]
        %v692 = vld [vmem:[#allocation10 + $0x4] sm:$0xf]
        %v693 = vld [vmem:[#allocation10 + $0x8] sm:$0xf]
        %v694 = vld [vmem:[#allocation10 + $0xc] sm:$0xf]
        %v695 = vld [vmem:[#allocation11] sm:$0x1]
        %v697 = vlaneseq
        %v698 = vshrl.u32 %v697, 7
        %v699 = vsub.s32 0, %v698
        %v700 = vrot.slane %v695, %v699
        %v706 = vunpack.c.l.b16 %v691
        %v707 = vunpack.c.l.b16 %v692
        %v708 = vunpack.c.l.b16 %v693
        %v709 = vunpack.c.l.b16 %v694
        %v710 = vpack.c.b16 %v707, %v706
        %v711 = vpack.c.b16 %v709, %v708
        %714 = vmatprep.subr.bf16.mxu0 0
        %715 = vmatpush1.bf16.msra.mxu0 %v710
        %716 = vmatprep.subr.bf16.mxu0 0
        %717 = vmatpush1.bf16.msra.mxu0 %v711
        %718 = vmatprep.subr.bf16.mxu0 0
        %719 = vmatpush1.bf16.msra.mxu0 0
        %720 = vmatprep.subr.bf16.mxu0 0
        %721 = vmatpush1.bf16.msra.mxu0 0
        %722 = vmatprep.subr.bf16.mxu0 0
        %723 = vmatpush1.bf16.msra.mxu0 0
        %724 = vmatprep.subr.bf16.mxu0 0
        %725 = vmatpush1.bf16.msra.mxu0 0
        %726 = vmatprep.subr.bf16.mxu0 0
        %727 = vmatpush1.bf16.msra.mxu0 0
        %728 = vmatprep.subr.bf16.mxu0 0
        %729 = vmatpush1.bf16.msra.mxu0 0
        %730 = vmatprep.subr.bf16.mxu0 0
        %731 = vmatpush1.bf16.msra.mxu0 0
        %732 = vmatprep.subr.bf16.mxu0 0
        %733 = vmatpush1.bf16.msra.mxu0 0
        %734 = vmatprep.subr.bf16.mxu0 0
        %735 = vmatpush1.bf16.msra.mxu0 0
        %736 = vmatprep.subr.bf16.mxu0 0
        %737 = vmatpush1.bf16.msra.mxu0 0
        %738 = vmatprep.subr.bf16.mxu0 0
        %739 = vmatpush1.bf16.msra.mxu0 0
        %740 = vmatprep.subr.bf16.mxu0 0
        %741 = vmatpush1.bf16.msra.mxu0 0
        %742 = vmatprep.subr.bf16.mxu0 0
        %743 = vmatpush1.bf16.msra.mxu0 0
        %744 = vmatprep.subr.bf16.mxu0 0
        %745 = vmatpush1.bf16.msra.mxu0 0
        %746 = vmatprep.mubr.bf16.mxu0 0
        %747 = vmatmul.mubr.bf16.gmra.mrb[0].mxu0 %v649
        %v748 = vpop.f32.mrb[0].mxu0
        %v749 = vadd.f32 %v700, %v748
        %v750 = vpop.f32.mrb[0].mxu0
        %v751 = vpop.f32.mrb[0].mxu0
        %v752 = vpop.f32.mrb[0].mxu0
        %753 = vdwg.mxu0
        %v754 = vld [vmem:[%s9] sm:$0xf]
        %v755 = vld [vmem:[%s9 + $0x4] sm:$0xf]
        %v756 = vld [vmem:[%s9 + $0x8] sm:$0xf]
        %v757 = vld [vmem:[%s9 + $0xc] sm:$0xf]
        %v758 = vld [vmem:[%s10] sm:$0x1]
        %v760 = vlaneseq
        %v761 = vshrl.u32 %v760, 7
        %v762 = vsub.s32 0, %v761
        %v763 = vrot.slane %v758, %v762
        %v769 = vunpack.c.l.b16 %v754
        %v770 = vunpack.c.l.b16 %v755
        %v771 = vunpack.c.l.b16 %v756
        %v772 = vunpack.c.l.b16 %v757
        %v773 = vpack.c.b16 %v770, %v769
        %v774 = vpack.c.b16 %v772, %v771
        %777 = vmatprep.subr.bf16.mxu0 0
        %778 = vmatpush1.bf16.msra.mxu0 %v773
        %779 = vmatprep.subr.bf16.mxu0 0
        %780 = vmatpush1.bf16.msra.mxu0 %v774
        %781 = vmatprep.subr.bf16.mxu0 0
        %782 = vmatpush1.bf16.msra.mxu0 0
        %783 = vmatprep.subr.bf16.mxu0 0
        %784 = vmatpush1.bf16.msra.mxu0 0
        %785 = vmatprep.subr.bf16.mxu0 0
        %786 = vmatpush1.bf16.msra.mxu0 0
        %787 = vmatprep.subr.bf16.mxu0 0
        %788 = vmatpush1.bf16.msra.mxu0 0
        %789 = vmatprep.subr.bf16.mxu0 0
        %790 = vmatpush1.bf16.msra.mxu0 0
        %791 = vmatprep.subr.bf16.mxu0 0
        %792 = vmatpush1.bf16.msra.mxu0 0
        %793 = vmatprep.subr.bf16.mxu0 0
        %794 = vmatpush1.bf16.msra.mxu0 0
        %795 = vmatprep.subr.bf16.mxu0 0
        %796 = vmatpush1.bf16.msra.mxu0 0
        %797 = vmatprep.subr.bf16.mxu0 0
        %798 = vmatpush1.bf16.msra.mxu0 0
        %799 = vmatprep.subr.bf16.mxu0 0
        %800 = vmatpush1.bf16.msra.mxu0 0
        %801 = vmatprep.subr.bf16.mxu0 0
        %802 = vmatpush1.bf16.msra.mxu0 0
        %803 = vmatprep.subr.bf16.mxu0 0
        %804 = vmatpush1.bf16.msra.mxu0 0
        %805 = vmatprep.subr.bf16.mxu0 0
        %806 = vmatpush1.bf16.msra.mxu0 0
        %807 = vmatprep.subr.bf16.mxu0 0
        %808 = vmatpush1.bf16.msra.mxu0 0
        %809 = vmatprep.mubr.bf16.mxu0 0
        %810 = vmatmul.mubr.bf16.gmra.mrb[0].mxu0 %v649
        %v811 = vpop.f32.mrb[0].mxu0
        %v812 = vadd.f32 %v763, %v811
        %v813 = vpop.f32.mrb[0].mxu0
        %v814 = vpop.f32.mrb[0].mxu0
        %v815 = vpop.f32.mrb[0].mxu0
        %816 = vdwg.mxu0
        %v817 = vmul.f32 %v686, 0.35355338
        %v818 = vpack.c.bf16 %v817, %v817
        %v819 = vpack.c.bf16 %v749, %v749
        %v820 = vpack.c.bf16 %v812, %v812
        %vm821 = vcmask 64512
        %v823 = vsel %vm821, %v818, 0
        %v826 = vsel %vm821, %v819, 0
        %828 = vmatprep.subr.bf16.mxu0 0
        %829 = vmatpush1.bf16.xpose.msra.mxu0 %v826
        %830 = vmatprep.subr.bf16.mxu0 0
        %831 = vmatpush1.bf16.xpose.msra.mxu0 0
        %832 = vmatprep.subr.bf16.mxu0 0
        %833 = vmatpush1.bf16.xpose.msra.mxu0 0
        %834 = vmatprep.subr.bf16.mxu0 0
        %835 = vmatpush1.bf16.xpose.msra.mxu0 0
        %836 = vmatprep.subr.bf16.mxu0 0
        %837 = vmatpush1.bf16.xpose.msra.mxu0 0
        %838 = vmatprep.subr.bf16.mxu0 0
        %839 = vmatpush1.bf16.xpose.msra.mxu0 0
        %840 = vmatprep.subr.bf16.mxu0 0
        %841 = vmatpush1.bf16.xpose.msra.mxu0 0
        %842 = vmatprep.subr.bf16.mxu0 0
        %843 = vmatpush1.bf16.xpose.msra.mxu0 0
        %844 = vmatprep.subr.bf16.mxu0 0
        %845 = vmatpush1.bf16.xpose.msra.mxu0 0
        %846 = vmatprep.subr.bf16.mxu0 0
        %847 = vmatpush1.bf16.xpose.msra.mxu0 0
        %848 = vmatprep.subr.bf16.mxu0 0
        %849 = vmatpush1.bf16.xpose.msra.mxu0 0
        %850 = vmatprep.subr.bf16.mxu0 0
        %851 = vmatpush1.bf16.xpose.msra.mxu0 0
        %852 = vmatprep.subr.bf16.mxu0 0
        %853 = vmatpush1.bf16.xpose.msra.mxu0 0
        %854 = vmatprep.subr.bf16.mxu0 0
        %855 = vmatpush1.bf16.xpose.msra.mxu0 0
        %856 = vmatprep.subr.bf16.mxu0 0
        %857 = vmatpush1.bf16.xpose.msra.mxu0 0
        %858 = vmatprep.subr.bf16.mxu0 0
        %859 = vmatpush1.bf16.xpose.msra.mxu0 0
        %860 = vmatprep.mubr.bf16.mxu0 0
        %861 = vmatmul.mubr.bf16.gmra.mrb[0].mxu0 %v823
        %v862 = vpop.f32.mrb[0].mxu0
        %v863 = vadd.f32 0.0, %v862
        %v864 = vpop.f32.mrb[0].mxu0
        %v865 = vpop.f32.mrb[0].mxu0
        %v866 = vpop.f32.mrb[0].mxu0
        %867 = vdwg.mxu0
        %vm868 = vcmp.gt.f32.partialorder %v583, 0.0
        %v869 = vsel %vm868, %v863, -1e+09
        %v870 = vsel %vm821, %v869, -inf
        %871 = vmax.xlane.f32.xlu0 %v870
        %v872 = vpop.xlane.xlu0 %871
        %v873 = vsub.f32 %v869, %v872
        %v874 = vmul.f32 %v873, 1.442695
        %v875 = vpow.pop %v874
        %v876 = vsel %vm821, %v875, 0.0
        %877 = vadd.xlane.f32.xlu0 %v876
        %v878 = vpop.xlane.xlu0 %877
        %v879 = vrcp.pop %v878
        %v880 = vmul.f32 1.0, %v879
        %v881 = vmul.f32 %v875, %v880
        %v882 = vpack.c.bf16 %v881, %v881
        %v884 = vsel %vm821, %v882, 0
        %vm886 = vcmask 1043456
        %v888 = vsel %vm886, %v820, 0
        %890 = vmatprep.subr.bf16.mxu0 0
        %891 = vmatpush1.bf16.msra.mxu0 %v888
        %892 = vmatprep.subr.bf16.mxu0 0
        %893 = vmatpush1.bf16.msra.mxu0 0
        %894 = vmatprep.subr.bf16.mxu0 0
        %895 = vmatpush1.bf16.msra.mxu0 0
        %896 = vmatprep.subr.bf16.mxu0 0
        %897 = vmatpush1.bf16.msra.mxu0 0
        %898 = vmatprep.subr.bf16.mxu0 0
        %899 = vmatpush1.bf16.msra.mxu0 0
        %900 = vmatprep.subr.bf16.mxu0 0
        %901 = vmatpush1.bf16.msra.mxu0 0
        %902 = vmatprep.subr.bf16.mxu0 0
        %903 = vmatpush1.bf16.msra.mxu0 0
        %904 = vmatprep.subr.bf16.mxu0 0
        %905 = vmatpush1.bf16.msra.mxu0 0
        %906 = vmatprep.subr.bf16.mxu0 0
        %907 = vmatpush1.bf16.msra.mxu0 0
        %908 = vmatprep.subr.bf16.mxu0 0
        %909 = vmatpush1.bf16.msra.mxu0 0
        %910 = vmatprep.subr.bf16.mxu0 0
        %911 = vmatpush1.bf16.msra.mxu0 0
        %912 = vmatprep.subr.bf16.mxu0 0
        %913 = vmatpush1.bf16.msra.mxu0 0
        %914 = vmatprep.subr.bf16.mxu0 0
        %915 = vmatpush1.bf16.msra.mxu0 0
        %916 = vmatprep.subr.bf16.mxu0 0
        %917 = vmatpush1.bf16.msra.mxu0 0
        %918 = vmatprep.subr.bf16.mxu0 0
        %919 = vmatpush1.bf16.msra.mxu0 0
        %920 = vmatprep.subr.bf16.mxu0 0
        %921 = vmatpush1.bf16.msra.mxu0 0
        %922 = vmatprep.mubr.bf16.mxu0 0
        %923 = vmatmul.mubr.bf16.gmra.mrb[0].mxu0 %v884
        %v924 = vpop.f32.mrb[0].mxu0
        %v925 = vadd.f32 0.0, %v924
        %v926 = vpop.f32.mrb[0].mxu0
        %v927 = vpop.f32.mrb[0].mxu0
        %v928 = vpop.f32.mrb[0].mxu0
        %929 = vdwg.mxu0
        %v930 = vpack.c.bf16 %v925, %v925
        %v931 = vld [vmem:[#allocation13] sm:$0xf]
        %933 = vrot.lane.b32.xlu0 %v818, 120
        %v934 = vpop.permute.xlu0 %933
        %936 = vrot.lane.b32.xlu0 %v819, 120
        %v937 = vpop.permute.xlu0 %936
        %v939 = vsel %vm821, %v934, 0
        %v942 = vsel %vm821, %v937, 0
        %944 = vmatprep.subr.bf16.mxu0 0
        %945 = vmatpush1.bf16.xpose.msra.mxu0 %v942
        %946 = vmatprep.subr.bf16.mxu0 0
        %947 = vmatpush1.bf16.xpose.msra.mxu0 0
        %948 = vmatprep.subr.bf16.mxu0 0
        %949 = vmatpush1.bf16.xpose.msra.mxu0 0
        %950 = vmatprep.subr.bf16.mxu0 0
        %951 = vmatpush1.bf16.xpose.msra.mxu0 0
        %952 = vmatprep.subr.bf16.mxu0 0
        %953 = vmatpush1.bf16.xpose.msra.mxu0 0
        %954 = vmatprep.subr.bf16.mxu0 0
        %955 = vmatpush1.bf16.xpose.msra.mxu0 0
        %956 = vmatprep.subr.bf16.mxu0 0
        %957 = vmatpush1.bf16.xpose.msra.mxu0 0
        %958 = vmatprep.subr.bf16.mxu0 0
        %959 = vmatpush1.bf16.xpose.msra.mxu0 0
        %960 = vmatprep.subr.bf16.mxu0 0
        %961 = vmatpush1.bf16.xpose.msra.mxu0 0
        %962 = vmatprep.subr.bf16.mxu0 0
        %963 = vmatpush1.bf16.xpose.msra.mxu0 0
        %964 = vmatprep.subr.bf16.mxu0 0
        %965 = vmatpush1.bf16.xpose.msra.mxu0 0
        %966 = vmatprep.subr.bf16.mxu0 0
        %967 = vmatpush1.bf16.xpose.msra.mxu0 0
        %968 = vmatprep.subr.bf16.mxu0 0
        %969 = vmatpush1.bf16.xpose.msra.mxu0 0
        %970 = vmatprep.subr.bf16.mxu0 0
        %971 = vmatpush1.bf16.xpose.msra.mxu0 0
        %972 = vmatprep.subr.bf16.mxu0 0
        %973 = vmatpush1.bf16.xpose.msra.mxu0 0
        %974 = vmatprep.subr.bf16.mxu0 0
        %975 = vmatpush1.bf16.xpose.msra.mxu0 0
        %976 = vmatprep.mubr.bf16.mxu0 0
        %977 = vmatmul.mubr.bf16.gmra.mrb[0].mxu0 %v939
        %v978 = vpop.f32.mrb[0].mxu0
        %v979 = vadd.f32 0.0, %v978
        %v980 = vpop.f32.mrb[0].mxu0
        %v981 = vpop.f32.mrb[0].mxu0
        %v982 = vpop.f32.mrb[0].mxu0
        %983 = vdwg.mxu0
        %v984 = vsel %vm868, %v979, -1e+09
        %v985 = vsel %vm821, %v984, -inf
        %986 = vmax.xlane.f32.xlu0 %v985
        %v987 = vpop.xlane.xlu0 %986
        %v988 = vsub.f32 %v984, %v987
        %v989 = vmul.f32 %v988, 1.442695
        %v990 = vpow.pop %v989
        %v991 = vsel %vm821, %v990, 0.0
        %992 = vadd.xlane.f32.xlu0 %v991
        %v993 = vpop.xlane.xlu0 %992
        %v994 = vrcp.pop %v993
        %v995 = vmul.f32 1.0, %v994
        %v996 = vmul.f32 %v990, %v995
        %v997 = vpack.c.bf16 %v996, %v996
        %999 = vrot.lane.b32.xlu0 %v820, 120
        %v1000 = vpop.permute.xlu0 %999
        %v1002 = vsel %vm821, %v997, 0
        %v1005 = vsel %vm886, %v1000, 0
        %1007 = vmatprep.subr.bf16.mxu0 0
        %1008 = vmatpush1.bf16.msra.mxu0 %v1005
        %1009 = vmatprep.subr.bf16.mxu0 0
        %1010 = vmatpush1.bf16.msra.mxu0 0
        %1011 = vmatprep.subr.bf16.mxu0 0
        %1012 = vmatpush1.bf16.msra.mxu0 0
        %1013 = vmatprep.subr.bf16.mxu0 0
        %1014 = vmatpush1.bf16.msra.mxu0 0
        %1015 = vmatprep.subr.bf16.mxu0 0
        %1016 = vmatpush1.bf16.msra.mxu0 0
        %1017 = vmatprep.subr.bf16.mxu0 0
        %1018 = vmatpush1.bf16.msra.mxu0 0
        %1019 = vmatprep.subr.bf16.mxu0 0
        %1020 = vmatpush1.bf16.msra.mxu0 0
        %1021 = vmatprep.subr.bf16.mxu0 0
        %1022 = vmatpush1.bf16.msra.mxu0 0
        %1023 = vmatprep.subr.bf16.mxu0 0
        %1024 = vmatpush1.bf16.msra.mxu0 0
        %1025 = vmatprep.subr.bf16.mxu0 0
        %1026 = vmatpush1.bf16.msra.mxu0 0
        %1027 = vmatprep.subr.bf16.mxu0 0
        %1028 = vmatpush1.bf16.msra.mxu0 0
        %1029 = vmatprep.subr.bf16.mxu0 0
        %1030 = vmatpush1.bf16.msra.mxu0 0
        %1031 = vmatprep.subr.bf16.mxu0 0
        %1032 = vmatpush1.bf16.msra.mxu0 0
        %1033 = vmatprep.subr.bf16.mxu0 0
        %1034 = vmatpush1.bf16.msra.mxu0 0
        %1035 = vmatprep.subr.bf16.mxu0 0
        %1036 = vmatpush1.bf16.msra.mxu0 0
        %1037 = vmatprep.subr.bf16.mxu0 0
        %1038 = vmatpush1.bf16.msra.mxu0 0
        %1039 = vmatprep.mubr.bf16.mxu0 0
        %1040 = vmatmul.mubr.bf16.gmra.mrb[0].mxu0 %v1002
        %v1041 = vpop.f32.mrb[0].mxu0
        %v1042 = vadd.f32 0.0, %v1041
        %v1043 = vpop.f32.mrb[0].mxu0
        %v1044 = vpop.f32.mrb[0].mxu0
        %v1045 = vpop.f32.mrb[0].mxu0
        %1046 = vdwg.mxu0
        %v1047 = vpack.c.bf16 %v1042, %v1042
        %s1048 = scalar_lea.vmem [#allocation13], 4
        %v1049 = vld [vmem:[%s1048] sm:$0xf]
        %v1051 = vsel %vm821, %v1047, 0
        %v1054 = vsel %vm886, %v1049, 0
        %1056 = vmatprep.subr.bf16.mxu0 0
        %1057 = vmatpush1.bf16.msra.mxu0 %v1054
        %1058 = vmatprep.subr.bf16.mxu0 0
        %1059 = vmatpush1.bf16.msra.mxu0 0
        %1060 = vmatprep.subr.bf16.mxu0 0
        %1061 = vmatpush1.bf16.msra.mxu0 0
        %1062 = vmatprep.subr.bf16.mxu0 0
        %1063 = vmatpush1.bf16.msra.mxu0 0
        %1064 = vmatprep.subr.bf16.mxu0 0
        %1065 = vmatpush1.bf16.msra.mxu0 0
        %1066 = vmatprep.subr.bf16.mxu0 0
        %1067 = vmatpush1.bf16.msra.mxu0 0
        %1068 = vmatprep.subr.bf16.mxu0 0
        %1069 = vmatpush1.bf16.msra.mxu0 0
        %1070 = vmatprep.subr.bf16.mxu0 0
        %1071 = vmatpush1.bf16.msra.mxu0 0
        %1072 = vmatprep.subr.bf16.mxu0 0
        %1073 = vmatpush1.bf16.msra.mxu0 0
        %1074 = vmatprep.subr.bf16.mxu0 0
        %1075 = vmatpush1.bf16.msra.mxu0 0
        %1076 = vmatprep.subr.bf16.mxu0 0
        %1077 = vmatpush1.bf16.msra.mxu0 0
        %1078 = vmatprep.subr.bf16.mxu0 0
        %1079 = vmatpush1.bf16.msra.mxu0 0
        %1080 = vmatprep.subr.bf16.mxu0 0
        %1081 = vmatpush1.bf16.msra.mxu0 0
        %1082 = vmatprep.subr.bf16.mxu0 0
        %1083 = vmatpush1.bf16.msra.mxu0 0
        %1084 = vmatprep.subr.bf16.mxu0 0
        %1085 = vmatpush1.bf16.msra.mxu0 0
        %1086 = vmatprep.subr.bf16.mxu0 0
        %1087 = vmatpush1.bf16.msra.mxu0 0
        %1088 = vmatprep.mubr.bf16.mxu0 0
        %1089 = vmatmul.mubr.bf16.gmra.mrb[0].mxu0 %v1051
        %v1090 = vpop.f32.mrb[0].mxu0
        %v1091 = vadd.f32 0.0, %v1090
        %v1092 = vpop.f32.mrb[0].mxu0
        %v1093 = vpop.f32.mrb[0].mxu0
        %v1094 = vpop.f32.mrb[0].mxu0
        %1095 = vdwg.mxu0
        %v1097 = vsel %vm821, %v930, 0
        %v1100 = vsel %vm886, %v931, 0
        %1102 = vmatprep.subr.bf16.mxu0 0
        %1103 = vmatpush1.bf16.msra.mxu0 %v1100
        %1104 = vmatprep.subr.bf16.mxu0 0
        %1105 = vmatpush1.bf16.msra.mxu0 0
        %1106 = vmatprep.subr.bf16.mxu0 0
        %1107 = vmatpush1.bf16.msra.mxu0 0
        %1108 = vmatprep.subr.bf16.mxu0 0
        %1109 = vmatpush1.bf16.msra.mxu0 0
        %1110 = vmatprep.subr.bf16.mxu0 0
        %1111 = vmatpush1.bf16.msra.mxu0 0
        %1112 = vmatprep.subr.bf16.mxu0 0
        %1113 = vmatpush1.bf16.msra.mxu0 0
        %1114 = vmatprep.subr.bf16.mxu0 0
        %1115 = vmatpush1.bf16.msra.mxu0 0
        %1116 = vmatprep.subr.bf16.mxu0 0
        %1117 = vmatpush1.bf16.msra.mxu0 0
        %1118 = vmatprep.subr.bf16.mxu0 0
        %1119 = vmatpush1.bf16.msra.mxu0 0
        %1120 = vmatprep.subr.bf16.mxu0 0
        %1121 = vmatpush1.bf16.msra.mxu0 0
        %1122 = vmatprep.subr.bf16.mxu0 0
        %1123 = vmatpush1.bf16.msra.mxu0 0
        %1124 = vmatprep.subr.bf16.mxu0 0
        %1125 = vmatpush1.bf16.msra.mxu0 0
        %1126 = vmatprep.subr.bf16.mxu0 0
        %1127 = vmatpush1.bf16.msra.mxu0 0
        %1128 = vmatprep.subr.bf16.mxu0 0
        %1129 = vmatpush1.bf16.msra.mxu0 0
        %1130 = vmatprep.subr.bf16.mxu0 0
        %1131 = vmatpush1.bf16.msra.mxu0 0
        %1132 = vmatprep.subr.bf16.mxu0 0
        %1133 = vmatpush1.bf16.msra.mxu0 0
        %1134 = vmatprep.mubr.bf16.mxu0 0
        %1135 = vmatmul.mubr.bf16.gmra.mrb[0].mxu0 %v1097
        %v1136 = vpop.f32.mrb[0].mxu0
        %v1137 = vadd.f32 %v1091, %v1136
        %v1138 = vpop.f32.mrb[0].mxu0
        %v1139 = vpop.f32.mrb[0].mxu0
        %v1140 = vpop.f32.mrb[0].mxu0
        %1141 = vdwg.mxu0
        %1142 = vrot.lane.b32.xlu0 %v818, 112
        %v1143 = vpop.permute.xlu0 %1142
        %1144 = vrot.lane.b32.xlu0 %v819, 112
        %v1145 = vpop.permute.xlu0 %1144
        %v1147 = vsel %vm821, %v1143, 0
        %v1150 = vsel %vm821, %v1145, 0
        %1152 = vmatprep.subr.bf16.mxu0 0
        %1153 = vmatpush1.bf16.xpose.msra.mxu0 %v1150
        %1154 = vmatprep.subr.bf16.mxu0 0
        %1155 = vmatpush1.bf16.xpose.msra.mxu0 0
        %1156 = vmatprep.subr.bf16.mxu0 0
        %1157 = vmatpush1.bf16.xpose.msra.mxu0 0
        %1158 = vmatprep.subr.bf16.mxu0 0
        %1159 = vmatpush1.bf16.xpose.msra.mxu0 0
        %1160 = vmatprep.subr.bf16.mxu0 0
        %1161 = vmatpush1.bf16.xpose.msra.mxu0 0
        %1162 = vmatprep.subr.bf16.mxu0 0
        %1163 = vmatpush1.bf16.xpose.msra.mxu0 0
        %1164 = vmatprep.subr.bf16.mxu0 0
        %1165 = vmatpush1.bf16.xpose.msra.mxu0 0
        %1166 = vmatprep.subr.bf16.mxu0 0
        %1167 = vmatpush1.bf16.xpose.msra.mxu0 0
        %1168 = vmatprep.subr.bf16.mxu0 0
        %1169 = vmatpush1.bf16.xpose.msra.mxu0 0
        %1170 = vmatprep.subr.bf16.mxu0 0
        %1171 = vmatpush1.bf16.xpose.msra.mxu0 0
        %1172 = vmatprep.subr.bf16.mxu0 0
        %1173 = vmatpush1.bf16.xpose.msra.mxu0 0
        %1174 = vmatprep.subr.bf16.mxu0 0
        %1175 = vmatpush1.bf16.xpose.msra.mxu0 0
        %1176 = vmatprep.subr.bf16.mxu0 0
        %1177 = vmatpush1.bf16.xpose.msra.mxu0 0
        %1178 = vmatprep.subr.bf16.mxu0 0
        %1179 = vmatpush1.bf16.xpose.msra.mxu0 0
        %1180 = vmatprep.subr.bf16.mxu0 0
        %1181 = vmatpush1.bf16.xpose.msra.mxu0 0
        %1182 = vmatprep.subr.bf16.mxu0 0
        %1183 = vmatpush1.bf16.xpose.msra.mxu0 0
        %1184 = vmatprep.mubr.bf16.mxu0 0
        %1185 = vmatmul.mubr.bf16.gmra.mrb[0].mxu0 %v1147
        %v1186 = vpop.f32.mrb[0].mxu0
        %v1187 = vadd.f32 0.0, %v1186
        %v1188 = vpop.f32.mrb[0].mxu0
        %v1189 = vpop.f32.mrb[0].mxu0
        %v1190 = vpop.f32.mrb[0].mxu0
        %1191 = vdwg.mxu0
        %v1192 = vsel %vm868, %v1187, -1e+09
        %v1193 = vsel %vm821, %v1192, -inf
        %1194 = vmax.xlane.f32.xlu0 %v1193
        %v1195 = vpop.xlane.xlu0 %1194
        %v1196 = vsub.f32 %v1192, %v1195
        %v1197 = vmul.f32 %v1196, 1.442695
        %v1198 = vpow.pop %v1197
        %v1199 = vsel %vm821, %v1198, 0.0
        %1200 = vadd.xlane.f32.xlu0 %v1199
        %v1201 = vpop.xlane.xlu0 %1200
        %v1202 = vrcp.pop %v1201
        %v1203 = vmul.f32 1.0, %v1202
        %v1204 = vmul.f32 %v1198, %v1203
        %v1205 = vpack.c.bf16 %v1204, %v1204
        %1206 = vrot.lane.b32.xlu0 %v820, 112
        %v1207 = vpop.permute.xlu0 %1206
        %v1209 = vsel %vm821, %v1205, 0
        %v1212 = vsel %vm886, %v1207, 0
        %1214 = vmatprep.subr.bf16.mxu0 0
        %1215 = vmatpush1.bf16.msra.mxu0 %v1212
        %1216 = vmatprep.subr.bf16.mxu0 0
        %1217 = vmatpush1.bf16.msra.mxu0 0
        %1218 = vmatprep.subr.bf16.mxu0 0
        %1219 = vmatpush1.bf16.msra.mxu0 0
        %1220 = vmatprep.subr.bf16.mxu0 0
        %1221 = vmatpush1.bf16.msra.mxu0 0
        %1222 = vmatprep.subr.bf16.mxu0 0
        %1223 = vmatpush1.bf16.msra.mxu0 0
        %1224 = vmatprep.subr.bf16.mxu0 0
        %1225 = vmatpush1.bf16.msra.mxu0 0
        %1226 = vmatprep.subr.bf16.mxu0 0
        %1227 = vmatpush1.bf16.msra.mxu0 0
        %1228 = vmatprep.subr.bf16.mxu0 0
        %1229 = vmatpush1.bf16.msra.mxu0 0
        %1230 = vmatprep.subr.bf16.mxu0 0
        %1231 = vmatpush1.bf16.msra.mxu0 0
        %1232 = vmatprep.subr.bf16.mxu0 0
        %1233 = vmatpush1.bf16.msra.mxu0 0
        %1234 = vmatprep.subr.bf16.mxu0 0
        %1235 = vmatpush1.bf16.msra.mxu0 0
        %1236 = vmatprep.subr.bf16.mxu0 0
        %1237 = vmatpush1.bf16.msra.mxu0 0
        %1238 = vmatprep.subr.bf16.mxu0 0
        %1239 = vmatpush1.bf16.msra.mxu0 0
        %1240 = vmatprep.subr.bf16.mxu0 0
        %1241 = vmatpush1.bf16.msra.mxu0 0
        %1242 = vmatprep.subr.bf16.mxu0 0
        %1243 = vmatpush1.bf16.msra.mxu0 0
        %1244 = vmatprep.subr.bf16.mxu0 0
        %1245 = vmatpush1.bf16.msra.mxu0 0
        %1246 = vmatprep.mubr.bf16.mxu0 0
        %1247 = vmatmul.mubr.bf16.gmra.mrb[0].mxu0 %v1209
        %v1248 = vpop.f32.mrb[0].mxu0
        %v1249 = vadd.f32 0.0, %v1248
        %v1250 = vpop.f32.mrb[0].mxu0
        %v1251 = vpop.f32.mrb[0].mxu0
        %v1252 = vpop.f32.mrb[0].mxu0
        %1253 = vdwg.mxu0
        %v1254 = vpack.c.bf16 %v1249, %v1249
        %s1255 = scalar_lea.vmem [#allocation13], 8
        %v1256 = vld [vmem:[%s1255] sm:$0xf]
        %v1258 = vsel %vm821, %v1254, 0
        %v1261 = vsel %vm886, %v1256, 0
        %1263 = vmatprep.subr.bf16.mxu0 0
        %1264 = vmatpush1.bf16.msra.mxu0 %v1261
        %1265 = vmatprep.subr.bf16.mxu0 0
        %1266 = vmatpush1.bf16.msra.mxu0 0
        %1267 = vmatprep.subr.bf16.mxu0 0
        %1268 = vmatpush1.bf16.msra.mxu0 0
        %1269 = vmatprep.subr.bf16.mxu0 0
        %1270 = vmatpush1.bf16.msra.mxu0 0
        %1271 = vmatprep.subr.bf16.mxu0 0
        %1272 = vmatpush1.bf16.msra.mxu0 0
        %1273 = vmatprep.subr.bf16.mxu0 0
        %1274 = vmatpush1.bf16.msra.mxu0 0
        %1275 = vmatprep.subr.bf16.mxu0 0
        %1276 = vmatpush1.bf16.msra.mxu0 0
        %1277 = vmatprep.subr.bf16.mxu0 0
        %1278 = vmatpush1.bf16.msra.mxu0 0
        %1279 = vmatprep.subr.bf16.mxu0 0
        %1280 = vmatpush1.bf16.msra.mxu0 0
        %1281 = vmatprep.subr.bf16.mxu0 0
        %1282 = vmatpush1.bf16.msra.mxu0 0
        %1283 = vmatprep.subr.bf16.mxu0 0
        %1284 = vmatpush1.bf16.msra.mxu0 0
        %1285 = vmatprep.subr.bf16.mxu0 0
        %1286 = vmatpush1.bf16.msra.mxu0 0
        %1287 = vmatprep.subr.bf16.mxu0 0
        %1288 = vmatpush1.bf16.msra.mxu0 0
        %1289 = vmatprep.subr.bf16.mxu0 0
        %1290 = vmatpush1.bf16.msra.mxu0 0
        %1291 = vmatprep.subr.bf16.mxu0 0
        %1292 = vmatpush1.bf16.msra.mxu0 0
        %1293 = vmatprep.subr.bf16.mxu0 0
        %1294 = vmatpush1.bf16.msra.mxu0 0
        %1295 = vmatprep.mubr.bf16.mxu0 0
        %1296 = vmatmul.mubr.bf16.gmra.mrb[0].mxu0 %v1258
        %v1297 = vpop.f32.mrb[0].mxu0
        %v1298 = vadd.f32 0.0, %v1297
        %v1299 = vpop.f32.mrb[0].mxu0
        %v1300 = vpop.f32.mrb[0].mxu0
        %v1301 = vpop.f32.mrb[0].mxu0
        %1302 = vdwg.mxu0
        %v1303 = vadd.f32 %v1137, %v1298
        %1304 = vrot.lane.b32.xlu0 %v818, 104
        %v1305 = vpop.permute.xlu0 %1304
        %1306 = vrot.lane.b32.xlu0 %v819, 104
        %v1307 = vpop.permute.xlu0 %1306
        %v1309 = vsel %vm821, %v1305, 0
        %v1312 = vsel %vm821, %v1307, 0
        %1314 = vmatprep.subr.bf16.mxu0 0
        %1315 = vmatpush1.bf16.xpose.msra.mxu0 %v1312
        %1316 = vmatprep.subr.bf16.mxu0 0
        %1317 = vmatpush1.bf16.xpose.msra.mxu0 0
        %1318 = vmatprep.subr.bf16.mxu0 0
        %1319 = vmatpush1.bf16.xpose.msra.mxu0 0
        %1320 = vmatprep.subr.bf16.mxu0 0
        %1321 = vmatpush1.bf16.xpose.msra.mxu0 0
        %1322 = vmatprep.subr.bf16.mxu0 0
        %1323 = vmatpush1.bf16.xpose.msra.mxu0 0
        %1324 = vmatprep.subr.bf16.mxu0 0
        %1325 = vmatpush1.bf16.xpose.msra.mxu0 0
        %1326 = vmatprep.subr.bf16.mxu0 0
        %1327 = vmatpush1.bf16.xpose.msra.mxu0 0
        %1328 = vmatprep.subr.bf16.mxu0 0
        %1329 = vmatpush1.bf16.xpose.msra.mxu0 0
        %1330 = vmatprep.subr.bf16.mxu0 0
        %1331 = vmatpush1.bf16.xpose.msra.mxu0 0
        %1332 = vmatprep.subr.bf16.mxu0 0
        %1333 = vmatpush1.bf16.xpose.msra.mxu0 0
        %1334 = vmatprep.subr.bf16.mxu0 0
        %1335 = vmatpush1.bf16.xpose.msra.mxu0 0
        %1336 = vmatprep.subr.bf16.mxu0 0
        %1337 = vmatpush1.bf16.xpose.msra.mxu0 0
        %1338 = vmatprep.subr.bf16.mxu0 0
        %1339 = vmatpush1.bf16.xpose.msra.mxu0 0
        %1340 = vmatprep.subr.bf16.mxu0 0
        %1341 = vmatpush1.bf16.xpose.msra.mxu0 0
        %1342 = vmatprep.subr.bf16.mxu0 0
        %1343 = vmatpush1.bf16.xpose.msra.mxu0 0
        %1344 = vmatprep.subr.bf16.mxu0 0
        %1345 = vmatpush1.bf16.xpose.msra.mxu0 0
        %1346 = vmatprep.mubr.bf16.mxu0 0
        %1347 = vmatmul.mubr.bf16.gmra.mrb[0].mxu0 %v1309
        %v1348 = vpop.f32.mrb[0].mxu0
        %v1349 = vadd.f32 0.0, %v1348
        %v1350 = vpop.f32.mrb[0].mxu0
        %v1351 = vpop.f32.mrb[0].mxu0
        %v1352 = vpop.f32.mrb[0].mxu0
        %1353 = vdwg.mxu0
        %v1354 = vsel %vm868, %v1349, -1e+09
        %v1355 = vsel %vm821, %v1354, -inf
        %1356 = vmax.xlane.f32.xlu0 %v1355
        %v1357 = vpop.xlane.xlu0 %1356
        %v1358 = vsub.f32 %v1354, %v1357
        %v1359 = vmul.f32 %v1358, 1.442695
        %v1360 = vpow.pop %v1359
        %v1361 = vsel %vm821, %v1360, 0.0
        %1362 = vadd.xlane.f32.xlu0 %v1361
        %v1363 = vpop.xlane.xlu0 %1362
        %v1364 = vrcp.pop %v1363
        %v1365 = vmul.f32 1.0, %v1364
        %v1366 = vmul.f32 %v1360, %v1365
        %v1367 = vpack.c.bf16 %v1366, %v1366
        %1368 = vrot.lane.b32.xlu0 %v820, 104
        %v1369 = vpop.permute.xlu0 %1368
        %v1371 = vsel %vm821, %v1367, 0
        %v1374 = vsel %vm886, %v1369, 0
        %1376 = vmatprep.subr.bf16.mxu0 0
        %1377 = vmatpush1.bf16.msra.mxu0 %v1374
        %1378 = vmatprep.subr.bf16.mxu0 0
        %1379 = vmatpush1.bf16.msra.mxu0 0
        %1380 = vmatprep.subr.bf16.mxu0 0
        %1381 = vmatpush1.bf16.msra.mxu0 0
        %1382 = vmatprep.subr.bf16.mxu0 0
        %1383 = vmatpush1.bf16.msra.mxu0 0
        %1384 = vmatprep.subr.bf16.mxu0 0
        %1385 = vmatpush1.bf16.msra.mxu0 0
        %1386 = vmatprep.subr.bf16.mxu0 0
        %1387 = vmatpush1.bf16.msra.mxu0 0
        %1388 = vmatprep.subr.bf16.mxu0 0
        %1389 = vmatpush1.bf16.msra.mxu0 0
        %1390 = vmatprep.subr.bf16.mxu0 0
        %1391 = vmatpush1.bf16.msra.mxu0 0
        %1392 = vmatprep.subr.bf16.mxu0 0
        %1393 = vmatpush1.bf16.msra.mxu0 0
        %1394 = vmatprep.subr.bf16.mxu0 0
        %1395 = vmatpush1.bf16.msra.mxu0 0
        %1396 = vmatprep.subr.bf16.mxu0 0
        %1397 = vmatpush1.bf16.msra.mxu0 0
        %1398 = vmatprep.subr.bf16.mxu0 0
        %1399 = vmatpush1.bf16.msra.mxu0 0
        %1400 = vmatprep.subr.bf16.mxu0 0
        %1401 = vmatpush1.bf16.msra.mxu0 0
        %1402 = vmatprep.subr.bf16.mxu0 0
        %1403 = vmatpush1.bf16.msra.mxu0 0
        %1404 = vmatprep.subr.bf16.mxu0 0
        %1405 = vmatpush1.bf16.msra.mxu0 0
        %1406 = vmatprep.subr.bf16.mxu0 0
        %1407 = vmatpush1.bf16.msra.mxu0 0
        %1408 = vmatprep.mubr.bf16.mxu0 0
        %1409 = vmatmul.mubr.bf16.gmra.mrb[0].mxu0 %v1371
        %v1410 = vpop.f32.mrb[0].mxu0
        %v1411 = vadd.f32 0.0, %v1410
        %v1412 = vpop.f32.mrb[0].mxu0
        %v1413 = vpop.f32.mrb[0].mxu0
        %v1414 = vpop.f32.mrb[0].mxu0
        %1415 = vdwg.mxu0
        %v1416 = vpack.c.bf16 %v1411, %v1411
        %s1417 = scalar_lea.vmem [#allocation13], 12
        %v1418 = vld [vmem:[%s1417] sm:$0xf]
        %v1420 = vsel %vm821, %v1416, 0
        %v1423 = vsel %vm886, %v1418, 0
        %1425 = vmatprep.subr.bf16.mxu0 0
        %1426 = vmatpush1.bf16.msra.mxu0 %v1423
        %1427 = vmatprep.subr.bf16.mxu0 0
        %1428 = vmatpush1.bf16.msra.mxu0 0
        %1429 = vmatprep.subr.bf16.mxu0 0
        %1430 = vmatpush1.bf16.msra.mxu0 0
        %1431 = vmatprep.subr.bf16.mxu0 0
        %1432 = vmatpush1.bf16.msra.mxu0 0
        %1433 = vmatprep.subr.bf16.mxu0 0
        %1434 = vmatpush1.bf16.msra.mxu0 0
        %1435 = vmatprep.subr.bf16.mxu0 0
        %1436 = vmatpush1.bf16.msra.mxu0 0
        %1437 = vmatprep.subr.bf16.mxu0 0
        %1438 = vmatpush1.bf16.msra.mxu0 0
        %1439 = vmatprep.subr.bf16.mxu0 0
        %1440 = vmatpush1.bf16.msra.mxu0 0
        %1441 = vmatprep.subr.bf16.mxu0 0
        %1442 = vmatpush1.bf16.msra.mxu0 0
        %1443 = vmatprep.subr.bf16.mxu0 0
        %1444 = vmatpush1.bf16.msra.mxu0 0
        %1445 = vmatprep.subr.bf16.mxu0 0
        %1446 = vmatpush1.bf16.msra.mxu0 0
        %1447 = vmatprep.subr.bf16.mxu0 0
        %1448 = vmatpush1.bf16.msra.mxu0 0
        %1449 = vmatprep.subr.bf16.mxu0 0
        %1450 = vmatpush1.bf16.msra.mxu0 0
        %1451 = vmatprep.subr.bf16.mxu0 0
        %1452 = vmatpush1.bf16.msra.mxu0 0
        %1453 = vmatprep.subr.bf16.mxu0 0
        %1454 = vmatpush1.bf16.msra.mxu0 0
        %1455 = vmatprep.subr.bf16.mxu0 0
        %1456 = vmatpush1.bf16.msra.mxu0 0
        %1457 = vmatprep.mubr.bf16.mxu0 0
        %1458 = vmatmul.mubr.bf16.gmra.mrb[0].mxu0 %v1420
        %v1459 = vpop.f32.mrb[0].mxu0
        %v1460 = vadd.f32 0.0, %v1459
        %v1461 = vpop.f32.mrb[0].mxu0
        %v1462 = vpop.f32.mrb[0].mxu0
        %v1463 = vpop.f32.mrb[0].mxu0
        %1464 = vdwg.mxu0
        %v1465 = vadd.f32 %v1303, %v1460
        %v1466 = vld [vmem:[%s12] sm:$0x1]
        %v1468 = vlaneseq
        %v1469 = vshrl.u32 %v1468, 7
        %v1470 = vsub.s32 0, %v1469
        %v1471 = vrot.slane %v1466, %v1470
        %v1473 = vadd.f32 %v1465, %v1471
        %v1474 = vadd.f32 %v582, %v1473
        %1475 = vst.msk [vmem:[%s580] sm:$0xff] %vm586, %v1474
        %s1476 = sand.u32 %s331, 1
        %s1477 = scalar_lea.sflag [#allocation4], %s1476
        %s1478 = sand.u32 %s331, 1
        %s1479 = smul.addr %s1478, 8
        %s1480 = scalar_lea.vmem [#allocation14], %s1479
        // Predicated region
        $region101: #{tpu_custom_call.1} parent=71 // pred_check
          %p1481 = pneg %p341
        $region102: #{tpu_custom_call.1} parent=71 // pred_check_branch
          %1483 = sbr.rel (%p1481) target = $region104
        $region103: #{tpu_custom_call.1} parent=71 // pred_region
          %s1485 = ssub.s32 128, 128
          %1486 = vsyncadd %s1477, %s1485
          %s1487 = smul.addr %s35, 128
          %s1488 = scalar_lea.hbm %s13, %s1487
          %s1490 = sshll.u32 %s1480, 4
          %s1491 = int_to_ptr.vmem [resolvable:$true] %s1490
          %1493 = dma.vmem_to_hbm [thread:$0]  %s1491, 128, %s1488, %s1477
        $region104: #{tpu_custom_call.1} parent=71 // pred_fallthru
          _
      $region72: #{tpu_custom_call.1} parent=5 // pred_fallthru
        _
      %p1494 = scmp.le.s32.totalorder 2, %s30
      // Predicated region
      $region105: #{tpu_custom_call.1} parent=5 // pred_check
        %p1495 = pneg %p1494
      $region106: #{tpu_custom_call.1} parent=5 // pred_check_branch
        %1497 = sbr.rel (%p1495) target = $region108
      $region107: #{tpu_custom_call.1} parent=5 // pred_region
        %s1498 = ssub.s32 %s30, 2
        // Predicated region
        $region109: #{tpu_custom_call.1} parent=107 // pred_check
          %p1499 = pneg %p347
        $region110: #{tpu_custom_call.1} parent=107 // pred_check_branch
          %1501 = sbr.rel (%p1499) target = $region112
        $region111: #{tpu_custom_call.1} parent=107 // pred_region
          %s1502 = sand.u32 %s332, 1
          %s1503 = scalar_lea.sflag [#allocation4], %s1502
          %s1504 = sand.u32 %s332, 1
          %s1505 = smul.addr %s1504, 8
          %s1506 = scalar_lea.vmem [#allocation14], %s1505
          %1507 = dma.done %s1503, 128
        $region112: #{tpu_custom_call.1} parent=107 // pred_fallthru
          _
      $region108: #{tpu_custom_call.1} parent=5 // pred_fallthru
        _
    $region6: #{tpu_custom_call.1} parent=1 // loop_footer
      %s34 = sadd.s32 1, %s30
    $region7: #{tpu_custom_call.1} parent=1 // loop_footer_branch
      %29 = sbr.rel target = $region3
    $region8: #{tpu_custom_call.1} parent=1 // loop_exit
      _
    %1508 = vsyncpa [#allocation3], 1
    %s1509 = scalar_lea.sflag [#allocation3], 1
    %1510 = vsyncpa %s1509, 1
    %1511 = vsyncpa [#allocation6], 1
    %s1512 = scalar_lea.sflag [#allocation6], 1
    %1513 = vsyncpa %s1512, 1
    %1514 = vsyncpa [#allocation9], 1
    %1515 = vsyncpa [#allocation12], 1
    %1516 = vsyncpa [#allocation4], 1
    %s1517 = scalar_lea.sflag [#allocation4], 1
    %1518 = vsyncpa %s1517, 1

</llo_original>
